<compile_context>
chip_gen: v7x
topology: tpu7x:2x2x1
jax: 0.10.0
libtpu: 0.0.40
codegen_flags: <defaults>
</compile_context>

<pallas_src>
import functools

import jax
import jax.numpy as jnp
from jax import lax
from jax.experimental import pallas as pl
from jax.experimental.pallas import tpu as pltpu

EPS = 1e-6


# ------------------------------ kernel bodies -------------------------------

def _bucket_scores(q_ref, k_ref, *, bucket_size, kv_bucket_size, dim, mxu_dtype):
    """R[t] = bucket-mean(q[t]) @ bucket-mean(k[t]).T * dim**-0.5 (TB slices)."""
    q = q_ref[...].astype(jnp.float32)            # (TB, seq, dim)
    k = k_ref[...].astype(jnp.float32)            # (TB, kseq, dim)
    tb, seq, d = q.shape
    kseq = k.shape[1]
    buckets = seq // bucket_size
    kv_buckets = kseq // kv_bucket_size
    # Bucket means via reshape + sublane reduce (XLU); no (buckets, seq) pool
    # matrix is built or kept resident, nothing is rebuilt per grid step.
    sq = q.reshape(tb, buckets, bucket_size, d).sum(axis=2) * (1.0 / bucket_size)
    sk = k.reshape(tb, kv_buckets, kv_bucket_size, d).sum(axis=2) * (1.0 / kv_bucket_size)
    r = jnp.einsum('tbd,tjd->tbj',
                   sq.astype(mxu_dtype), sk.astype(mxu_dtype),
                   preferred_element_type=jnp.float32)
    return r * (dim ** -0.5)                      # (TB, buckets, kv_buckets)


def _sinkhorn_kernel(q_ref, k_ref, u_ref, o_ref, *,
                     bucket_size, kv_bucket_size, dim,
                     temperature, sinkhorn_iter, mxu_dtype):
    scores = _bucket_scores(q_ref, k_ref, bucket_size=bucket_size,
                            kv_bucket_size=kv_bucket_size, dim=dim,
                            mxu_dtype=mxu_dtype)
    u = u_ref[...].astype(jnp.float32)            # uniform(0,1) gumbel noise
    r = jnp.log(jnp.maximum(scores, 0.0) + EPS)   # log(relu(R) + eps)
    gumbel = -jnp.log(-jnp.log(u + EPS) + EPS)
    r = (r + gumbel) / temperature

    def lse(x, axis):
        m = jnp.max(x, axis=axis, keepdims=True)
        return m + jnp.log(jnp.sum(jnp.exp(x - m), axis=axis, keepdims=True))

    # Batched over the whole (TB, buckets, kv_buckets) tile so every VPU/EUP
    # instruction covers TB slices at once.
    for _ in range(sinkhorn_iter):
        r = r - lse(r, axis=2)        # torch dim=2 (columns)
        r = r - lse(r, axis=1)        # torch dim=1 (rows)
    o_ref[...] = jnp.exp(r).astype(o_ref.dtype)


def _topk_kernel(q_ref, k_ref, o_ref, *,
                 bucket_size, kv_bucket_size, dim, topk_k, mxu_dtype):
    # differentiable_topk(R, k) -- module uses its default temperature of 1.0
    # for this branch (self.temperature is NOT passed).
    x = _bucket_scores(q_ref, k_ref, bucket_size=bucket_size,
                       kv_bucket_size=kv_bucket_size, dim=dim,
                       mxu_dtype=mxu_dtype)
    tb, buckets, kvb = x.shape
    cols = lax.broadcasted_iota(jnp.int32, (tb, buckets, kvb), 2)
    outs = []
    for i in range(topk_k):
        m = jnp.max(x, axis=-1, keepdims=True)
        # max(softmax(x)) == 1 / sum(exp(x - max)): no full-matrix divide, no
        # second row reduction (m is reused for the tie-break below).
        denom = jnp.sum(jnp.exp(x - m), axis=-1, keepdims=True)
        vmax = pl.reciprocal(denom, approx=False)
        # first-occurrence argmax (matches torch.topk tie-break)
        first = jnp.min(jnp.where(x == m, cols, kvb), axis=-1, keepdims=True)
        onehot = cols == first
        outs.append(jnp.where(onehot, vmax, 0.0))
        if i != topk_k - 1:
            x = jnp.where(onehot, -jnp.inf, x)
    # Single contiguous store of (TB, topk_k, buckets, kvb); the torch
    # interleave out[i*k + j] = outs[j][i] is a cheap wrapper-side transpose.
    o_ref[...] = jnp.stack(outs, axis=1).astype(o_ref.dtype)


# --------------------------------- wrapper -----------------------------------

def _choose_block_bh(bh, per_slice_bytes, budget_bytes=16 << 20):
    """Largest divisor of bh whose double-buffered blocks fit the VMEM budget.

    Keeps >= 2 grid steps (when bh >= 2) so the "parallel" bh axis can still be
    split across v7x's two TensorCores; the budget keeps blocks comfortably
    inside v7x's 64 MiB physical VMEM (and v5e/v6e scoped limits once
    vmem_limit_bytes is raised accordingly).
    """
    best = 1
    for tb in range(1, bh + 1):
        if bh % tb != 0:
            continue
        if bh >= 2 and bh // tb < 2:
            continue
        if 2 * tb * per_slice_bytes <= budget_bytes:   # x2 pipeline buffers
            best = tb
    return best


def attention_sort_net(q, k, *, heads, bucket_size, kv_bucket_size, dim,
                       non_permutative, temperature, sinkhorn_iter,
                       n_sortcut=0, topk=1, gumbel_key=None,
                       block_bh=None, mxu_dtype=jnp.float32):
    bh, seq, d = q.shape
    kseq = k.shape[1]
    eff_bucket_size = bucket_size if n_sortcut == 0 else seq     # bucket(1, q)
    assert seq % eff_bucket_size == 0 and kseq % kv_bucket_size == 0
    buckets = seq // eff_bucket_size
    kv_buckets = kseq // kv_bucket_size

    if non_permutative:
        topk_k = topk if n_sortcut == 0 else n_sortcut
        assert topk_k <= kv_buckets, "differentiable_topk requires k <= kv_buckets"
        out_elems = topk_k * buckets * kv_buckets
        extra_in = 0                                   # no gumbel noise DMA'd
    else:
        topk_k = 1
        out_elems = buckets * kv_buckets
        extra_in = buckets * kv_buckets                # uniform(0,1) noise

    per_slice_bytes = 4 * ((seq + kseq) * d + extra_in + out_elems)
    tb = block_bh if block_bh is not None else _choose_block_bh(bh, per_slice_bytes)
    assert bh % tb == 0
    grid = (bh // tb,)
    # Headroom for double-buffered blocks + in-kernel temporaries; capped so it
    # also fits v7x's 64 MiB physical VMEM.
    vmem_limit = int(min(48 << 20, max(32 << 20, 3 * tb * per_slice_bytes + (4 << 20))))
    cparams = pltpu.CompilerParams(dimension_semantics=("parallel",),
                                   vmem_limit_bytes=vmem_limit)

    q_spec = pl.BlockSpec((tb, seq, d), lambda b: (b, 0, 0))
    k_spec = pl.BlockSpec((tb, kseq, d), lambda b: (b, 0, 0))

    if non_permutative:
        kernel = functools.partial(
            _topk_kernel, bucket_size=eff_bucket_size,
            kv_bucket_size=kv_bucket_size, dim=dim, topk_k=topk_k,
            mxu_dtype=mxu_dtype)
        out4 = pl.pallas_call(
            kernel,
            out_shape=jax.ShapeDtypeStruct((bh, topk_k, buckets, kv_buckets),
                                           q.dtype),
            grid_spec=pltpu.PrefetchScalarGridSpec(
                num_scalar_prefetch=0, grid=grid,
                in_specs=[q_spec, k_spec],
                out_specs=pl.BlockSpec((tb, topk_k, buckets, kv_buckets),
                                       lambda b: (b, 0, 0, 0))),
            compiler_params=cparams,
        )(q, k)
        # torch: cat(dim=-1).reshape(k*n, m)  <=>  out[i*k + j] = outs[j][i]
        return jnp.transpose(out4, (0, 2, 1, 3)).reshape(
            bh, topk_k * buckets, kv_buckets)

    # gumbel uniform noise generated deterministically outside the kernel
    u = jax.random.uniform(gumbel_key, (bh, buckets, kv_buckets),
                           dtype=jnp.float32)
    kernel = functools.partial(
        _sinkhorn_kernel, bucket_size=eff_bucket_size,
        kv_bucket_size=kv_bucket_size, dim=dim,
        temperature=temperature, sinkhorn_iter=sinkhorn_iter,
        mxu_dtype=mxu_dtype)
    return pl.pallas_call(
        kernel,
        out_shape=jax.ShapeDtypeStruct((bh, buckets, kv_buckets), q.dtype),
        grid_spec=pltpu.PrefetchScalarGridSpec(
            num_scalar_prefetch=0, grid=grid,
            in_specs=[q_spec, k_spec,
                      pl.BlockSpec((tb, buckets, kv_buckets),
                                   lambda b: (b, 0, 0))],
            out_specs=pl.BlockSpec((tb, buckets, kv_buckets),
                                   lambda b: (b, 0, 0))),
        compiler_params=cparams,
    )(q, k, u)


# -------------------- pure-JAX reference for validation ----------------------

def _ref_forward(q, k, u, *, bucket_size, kv_bucket_size, dim,
                 non_permutative, topk_k, temperature, sinkhorn_iter):
    bh, seq, d = q.shape
    kseq = k.shape[1]
    buckets, kv_buckets = seq // bucket_size, kseq // kv_bucket_size
    sq = q.reshape(bh, buckets, bucket_size, d).mean(axis=2)
    sk = k.reshape(bh, kv_buckets, kv_bucket_size, d).mean(axis=2)
    R = jnp.einsum('bie,bje->bij', sq, sk) * (dim ** -0.5)
    if non_permutative:
        x = R
        outs = []
        for i in range(topk_k):
            p = jax.nn.softmax(x, axis=-1)
            vmax = jnp.max(p, axis=-1, keepdims=True)
            onehot = jax.nn.one_hot(jnp.argmax(x, axis=-1), x.shape[-1],
                                    dtype=bool)
            outs.append(jnp.where(onehot, vmax, 0.0))
            if i != topk_k - 1:
                x = jnp.where(onehot, -jnp.inf, x)
        topks = jnp.concatenate(outs, axis=-1)
        return topks.reshape(bh, topk_k * buckets, kv_buckets)
    r = jnp.log(jax.nn.relu(R) + EPS)
    g = -jnp.log(-jnp.log(u + EPS) + EPS)
    r = (r + g) / temperature
    for _ in range(sinkhorn_iter):
        r = r - jax.scipy.special.logsumexp(r, axis=2, keepdims=True)
        r = r - jax.scipy.special.logsumexp(r, axis=1, keepdims=True)
    return jnp.exp(r)


if __name__ == "__main__":
    # small config: batch=2, heads=4 -> bh=8, seq=64, head_dim=32, buckets of 8
    batch, heads, seq, dim = 2, 4, 64, 32
    bucket_size = kv_bucket_size = 8
    bh = batch * heads

    key = jax.random.PRNGKey(0)
    kq, kk, kg = jax.random.split(key, 3)
    q = jax.random.normal(kq, (bh, seq, dim), dtype=jnp.float32)
    k = jax.random.normal(kk, (bh, seq, dim), dtype=jnp.float32)

    cfg = dict(heads=heads, bucket_size=bucket_size,
               kv_bucket_size=kv_bucket_size, dim=dim,
               temperature=0.75, sinkhorn_iter=8, n_sortcut=0)

    # --- branch 1: gumbel-sinkhorn (non_permutative=False) ---
    out_sink = attention_sort_net(q, k, non_permutative=False,
                                  gumbel_key=kg, **cfg)
    jax.block_until_ready(out_sink)
    u = jax.random.uniform(kg, (bh, seq // bucket_size, seq // kv_bucket_size),
                           dtype=jnp.float32)
    ref_sink = _ref_forward(q, k, u, bucket_size=bucket_size,
                            kv_bucket_size=kv_bucket_size, dim=dim,
                            non_permutative=False, topk_k=1,
                            temperature=0.75, sinkhorn_iter=8)
    assert jnp.allclose(out_sink, ref_sink, atol=1e-4, rtol=1e-4)

    # --- branch 2: differentiable top-k (non_permutative=True, topk=1) ---
    out_topk1 = attention_sort_net(q, k, non_permutative=True, topk=1, **cfg)
    jax.block_until_ready(out_topk1)
    ref_topk1 = _ref_forward(q, k, None, bucket_size=bucket_size,
                             kv_bucket_size=kv_bucket_size, dim=dim,
                             non_permutative=True, topk_k=1,
                             temperature=1.0, sinkhorn_iter=8)
    assert jnp.allclose(out_topk1, ref_topk1, atol=1e-4, rtol=1e-4)

    # --- branch 3: top-k with k=2 (validates the interleaved layout path) ---
    out_topk2 = attention_sort_net(q, k, non_permutative=True, topk=2, **cfg)
    jax.block_until_ready(out_topk2)
    ref_topk2 = _ref_forward(q, k, None, bucket_size=bucket_size,
                             kv_bucket_size=kv_bucket_size, dim=dim,
                             non_permutative=True, topk_k=2,
                             temperature=1.0, sinkhorn_iter=8)
    assert jnp.allclose(out_topk2, ref_topk2, atol=1e-4, rtol=1e-4)

    # --- branch 4: n_sortcut > 0 (bucket(1, q) path) ---
    cfg_sc = dict(cfg, n_sortcut=2)
    out_sc = attention_sort_net(q, k, non_permutative=True, **cfg_sc)
    jax.block_until_ready(out_sc)
    ref_sc = _ref_forward(q, k, None, bucket_size=seq,
                          kv_bucket_size=kv_bucket_size, dim=dim,
                          non_permutative=True, topk_k=2,
                          temperature=1.0, sinkhorn_iter=8)
    assert jnp.allclose(out_sc, ref_sc, atol=1e-4, rtol=1e-4)

    print("KERNEL_OK")
</pallas_src>

<mosaic_0001>
module attributes {stable_mosaic.version = 11 : i64} {
  func.func @_sinkhorn_kernel(%arg0: i32, %arg1: memref<4x64x32xf32, #tpu.memory_space<vmem>>, %arg2: memref<4x64x32xf32, #tpu.memory_space<vmem>>, %arg3: memref<4x8x8xf32, #tpu.memory_space<vmem>>, %arg4: memref<4x8x8xf32, #tpu.memory_space<vmem>>) attributes {dimension_semantics = [#tpu.dimension_semantics<parallel>], iteration_bounds = array<i64: 2>, scalar_prefetch = 0 : i64, scratch_operands = 0 : i64, tpu.core_type = #tpu.core_type<tc>, window_params = [{transform_indices = @transform_0, window_bounds = array<i64: 4, 64, 32>}, {transform_indices = @transform_1, window_bounds = array<i64: 4, 64, 32>}, {transform_indices = @transform_2, window_bounds = array<i64: 4, 8, 8>}, {transform_indices = @transform_3, window_bounds = array<i64: 4, 8, 8>}]} {
    %c0 = arith.constant 0 : index
    %c0_0 = arith.constant 0 : index
    %c0_1 = arith.constant 0 : index
    %0 = vector.load %arg1[%c0, %c0_0, %c0_1] : memref<4x64x32xf32, #tpu.memory_space<vmem>>, vector<4x64x32xf32>
    %c0_2 = arith.constant 0 : index
    %c0_3 = arith.constant 0 : index
    %c0_4 = arith.constant 0 : index
    %1 = vector.load %arg2[%c0_2, %c0_3, %c0_4] : memref<4x64x32xf32, #tpu.memory_space<vmem>>, vector<4x64x32xf32>
    %2 = vector.shape_cast %0 : vector<4x64x32xf32> to vector<4x8x8x32xf32>
    %cst = arith.constant dense<0.000000e+00> : vector<4x8x32xf32>
    %3 = vector.multi_reduction <add>, %2, %cst [2] : vector<4x8x8x32xf32> to vector<4x8x32xf32>
    %cst_5 = arith.constant 1.250000e-01 : f32
    %4 = vector.broadcast %cst_5 : f32 to vector<4x8x32xf32>
    %5 = arith.mulf %3, %4 : vector<4x8x32xf32>
    %6 = vector.shape_cast %1 : vector<4x64x32xf32> to vector<4x8x8x32xf32>
    %cst_6 = arith.constant dense<0.000000e+00> : vector<4x8x32xf32>
    %7 = vector.multi_reduction <add>, %6, %cst_6 [2] : vector<4x8x8x32xf32> to vector<4x8x32xf32>
    %cst_7 = arith.constant 1.250000e-01 : f32
    %8 = vector.broadcast %cst_7 : f32 to vector<4x8x32xf32>
    %9 = arith.mulf %7, %8 : vector<4x8x32xf32>
    "tpu.trace_start"() <{level = 10 : i32, message = "tbd,tjd->tbj"}> : () -> ()
    %cst_8 = arith.constant dense<0.000000e+00> : vector<4x8x8xf32>
    %10 = tpu.matmul %5, %9, %cst_8 {dimension_numbers = #tpu.dot_dimension_numbers<[2], [2], [1], [1], [0, 0, 0, 1, 1, 1], [0], [0]>} : vector<4x8x32xf32>, vector<4x8x32xf32>, vector<4x8x8xf32> -> vector<4x8x8xf32>
    "tpu.trace_stop"() : () -> ()
    %cst_9 = arith.constant 0.176776692 : f32
    %11 = vector.broadcast %cst_9 : f32 to vector<4x8x8xf32>
    %12 = arith.mulf %10, %11 : vector<4x8x8xf32>
    %c0_10 = arith.constant 0 : index
    %c0_11 = arith.constant 0 : index
    %c0_12 = arith.constant 0 : index
    %13 = vector.load %arg3[%c0_10, %c0_11, %c0_12] : memref<4x8x8xf32, #tpu.memory_space<vmem>>, vector<4x8x8xf32>
    %cst_13 = arith.constant 0.000000e+00 : f32
    %14 = vector.broadcast %cst_13 : f32 to vector<4x8x8xf32>
    %15 = arith.maximumf %12, %14 : vector<4x8x8xf32>
    %cst_14 = arith.constant 9.99999997E-7 : f32
    %16 = vector.broadcast %cst_14 : f32 to vector<4x8x8xf32>
    %17 = arith.addf %15, %16 : vector<4x8x8xf32>
    %18 = math.log %17 : vector<4x8x8xf32>
    %cst_15 = arith.constant 9.99999997E-7 : f32
    %19 = vector.broadcast %cst_15 : f32 to vector<4x8x8xf32>
    %20 = arith.addf %13, %19 : vector<4x8x8xf32>
    %21 = math.log %20 : vector<4x8x8xf32>
    %cst_16 = arith.constant 0.000000e+00 : f32
    %22 = vector.broadcast %cst_16 : f32 to vector<4x8x8xf32>
    %23 = arith.subf %22, %21 : vector<4x8x8xf32>
    %cst_17 = arith.constant 9.99999997E-7 : f32
    %24 = vector.broadcast %cst_17 : f32 to vector<4x8x8xf32>
    %25 = arith.addf %23, %24 : vector<4x8x8xf32>
    %26 = math.log %25 : vector<4x8x8xf32>
    %cst_18 = arith.constant 0.000000e+00 : f32
    %27 = vector.broadcast %cst_18 : f32 to vector<4x8x8xf32>
    %28 = arith.subf %27, %26 : vector<4x8x8xf32>
    %29 = arith.addf %18, %28 : vector<4x8x8xf32>
    %cst_19 = arith.constant 7.500000e-01 : f32
    %30 = vector.broadcast %cst_19 : f32 to vector<4x8x8xf32>
    %31 = arith.divf %29, %30 : vector<4x8x8xf32>
    %cst_20 = arith.constant dense<0xFF800000> : vector<4x8xf32>
    %32 = vector.multi_reduction <maximumf>, %31, %cst_20 [2] : vector<4x8x8xf32> to vector<4x8xf32>
    %33 = vector.shape_cast %32 : vector<4x8xf32> to vector<4x8x1xf32>
    %34 = vector.broadcast %33 : vector<4x8x1xf32> to vector<4x8x8xf32>
    %35 = arith.subf %31, %34 : vector<4x8x8xf32>
    %36 = math.exp %35 : vector<4x8x8xf32>
    %cst_21 = arith.constant dense<0.000000e+00> : vector<4x8xf32>
    %37 = vector.multi_reduction <add>, %36, %cst_21 [2] : vector<4x8x8xf32> to vector<4x8xf32>
    %38 = vector.shape_cast %37 : vector<4x8xf32> to vector<4x8x1xf32>
    %39 = math.log %38 : vector<4x8x1xf32>
    %40 = arith.addf %33, %39 : vector<4x8x1xf32>
    %41 = vector.broadcast %40 : vector<4x8x1xf32> to vector<4x8x8xf32>
    %42 = arith.subf %31, %41 : vector<4x8x8xf32>
    %cst_22 = arith.constant dense<0xFF800000> : vector<4x8xf32>
    %43 = vector.multi_reduction <maximumf>, %42, %cst_22 [1] : vector<4x8x8xf32> to vector<4x8xf32>
    %44 = vector.shape_cast %43 : vector<4x8xf32> to vector<4x1x8xf32>
    %45 = vector.broadcast %44 : vector<4x1x8xf32> to vector<4x8x8xf32>
    %46 = arith.subf %42, %45 : vector<4x8x8xf32>
    %47 = math.exp %46 : vector<4x8x8xf32>
    %cst_23 = arith.constant dense<0.000000e+00> : vector<4x8xf32>
    %48 = vector.multi_reduction <add>, %47, %cst_23 [1] : vector<4x8x8xf32> to vector<4x8xf32>
    %49 = vector.shape_cast %48 : vector<4x8xf32> to vector<4x1x8xf32>
    %50 = math.log %49 : vector<4x1x8xf32>
    %51 = arith.addf %44, %50 : vector<4x1x8xf32>
    %52 = vector.broadcast %51 : vector<4x1x8xf32> to vector<4x8x8xf32>
    %53 = arith.subf %42, %52 : vector<4x8x8xf32>
    %cst_24 = arith.constant dense<0xFF800000> : vector<4x8xf32>
    %54 = vector.multi_reduction <maximumf>, %53, %cst_24 [2] : vector<4x8x8xf32> to vector<4x8xf32>
    %55 = vector.shape_cast %54 : vector<4x8xf32> to vector<4x8x1xf32>
    %56 = vector.broadcast %55 : vector<4x8x1xf32> to vector<4x8x8xf32>
    %57 = arith.subf %53, %56 : vector<4x8x8xf32>
    %58 = math.exp %57 : vector<4x8x8xf32>
    %cst_25 = arith.constant dense<0.000000e+00> : vector<4x8xf32>
    %59 = vector.multi_reduction <add>, %58, %cst_25 [2] : vector<4x8x8xf32> to vector<4x8xf32>
    %60 = vector.shape_cast %59 : vector<4x8xf32> to vector<4x8x1xf32>
    %61 = math.log %60 : vector<4x8x1xf32>
    %62 = arith.addf %55, %61 : vector<4x8x1xf32>
    %63 = vector.broadcast %62 : vector<4x8x1xf32> to vector<4x8x8xf32>
    %64 = arith.subf %53, %63 : vector<4x8x8xf32>
    %cst_26 = arith.constant dense<0xFF800000> : vector<4x8xf32>
    %65 = vector.multi_reduction <maximumf>, %64, %cst_26 [1] : vector<4x8x8xf32> to vector<4x8xf32>
    %66 = vector.shape_cast %65 : vector<4x8xf32> to vector<4x1x8xf32>
    %67 = vector.broadcast %66 : vector<4x1x8xf32> to vector<4x8x8xf32>
    %68 = arith.subf %64, %67 : vector<4x8x8xf32>
    %69 = math.exp %68 : vector<4x8x8xf32>
    %cst_27 = arith.constant dense<0.000000e+00> : vector<4x8xf32>
    %70 = vector.multi_reduction <add>, %69, %cst_27 [1] : vector<4x8x8xf32> to vector<4x8xf32>
    %71 = vector.shape_cast %70 : vector<4x8xf32> to vector<4x1x8xf32>
    %72 = math.log %71 : vector<4x1x8xf32>
    %73 = arith.addf %66, %72 : vector<4x1x8xf32>
    %74 = vector.broadcast %73 : vector<4x1x8xf32> to vector<4x8x8xf32>
    %75 = arith.subf %64, %74 : vector<4x8x8xf32>
    %cst_28 = arith.constant dense<0xFF800000> : vector<4x8xf32>
    %76 = vector.multi_reduction <maximumf>, %75, %cst_28 [2] : vector<4x8x8xf32> to vector<4x8xf32>
    %77 = vector.shape_cast %76 : vector<4x8xf32> to vector<4x8x1xf32>
    %78 = vector.broadcast %77 : vector<4x8x1xf32> to vector<4x8x8xf32>
    %79 = arith.subf %75, %78 : vector<4x8x8xf32>
    %80 = math.exp %79 : vector<4x8x8xf32>
    %cst_29 = arith.constant dense<0.000000e+00> : vector<4x8xf32>
    %81 = vector.multi_reduction <add>, %80, %cst_29 [2] : vector<4x8x8xf32> to vector<4x8xf32>
    %82 = vector.shape_cast %81 : vector<4x8xf32> to vector<4x8x1xf32>
    %83 = math.log %82 : vector<4x8x1xf32>
    %84 = arith.addf %77, %83 : vector<4x8x1xf32>
    %85 = vector.broadcast %84 : vector<4x8x1xf32> to vector<4x8x8xf32>
    %86 = arith.subf %75, %85 : vector<4x8x8xf32>
    %cst_30 = arith.constant dense<0xFF800000> : vector<4x8xf32>
    %87 = vector.multi_reduction <maximumf>, %86, %cst_30 [1] : vector<4x8x8xf32> to vector<4x8xf32>
    %88 = vector.shape_cast %87 : vector<4x8xf32> to vector<4x1x8xf32>
    %89 = vector.broadcast %88 : vector<4x1x8xf32> to vector<4x8x8xf32>
    %90 = arith.subf %86, %89 : vector<4x8x8xf32>
    %91 = math.exp %90 : vector<4x8x8xf32>
    %cst_31 = arith.constant dense<0.000000e+00> : vector<4x8xf32>
    %92 = vector.multi_reduction <add>, %91, %cst_31 [1] : vector<4x8x8xf32> to vector<4x8xf32>
    %93 = vector.shape_cast %92 : vector<4x8xf32> to vector<4x1x8xf32>
    %94 = math.log %93 : vector<4x1x8xf32>
    %95 = arith.addf %88, %94 : vector<4x1x8xf32>
    %96 = vector.broadcast %95 : vector<4x1x8xf32> to vector<4x8x8xf32>
    %97 = arith.subf %86, %96 : vector<4x8x8xf32>
    %cst_32 = arith.constant dense<0xFF800000> : vector<4x8xf32>
    %98 = vector.multi_reduction <maximumf>, %97, %cst_32 [2] : vector<4x8x8xf32> to vector<4x8xf32>
    %99 = vector.shape_cast %98 : vector<4x8xf32> to vector<4x8x1xf32>
    %100 = vector.broadcast %99 : vector<4x8x1xf32> to vector<4x8x8xf32>
    %101 = arith.subf %97, %100 : vector<4x8x8xf32>
    %102 = math.exp %101 : vector<4x8x8xf32>
    %cst_33 = arith.constant dense<0.000000e+00> : vector<4x8xf32>
    %103 = vector.multi_reduction <add>, %102, %cst_33 [2] : vector<4x8x8xf32> to vector<4x8xf32>
    %104 = vector.shape_cast %103 : vector<4x8xf32> to vector<4x8x1xf32>
    %105 = math.log %104 : vector<4x8x1xf32>
    %106 = arith.addf %99, %105 : vector<4x8x1xf32>
    %107 = vector.broadcast %106 : vector<4x8x1xf32> to vector<4x8x8xf32>
    %108 = arith.subf %97, %107 : vector<4x8x8xf32>
    %cst_34 = arith.constant dense<0xFF800000> : vector<4x8xf32>
    %109 = vector.multi_reduction <maximumf>, %108, %cst_34 [1] : vector<4x8x8xf32> to vector<4x8xf32>
    %110 = vector.shape_cast %109 : vector<4x8xf32> to vector<4x1x8xf32>
    %111 = vector.broadcast %110 : vector<4x1x8xf32> to vector<4x8x8xf32>
    %112 = arith.subf %108, %111 : vector<4x8x8xf32>
    %113 = math.exp %112 : vector<4x8x8xf32>
    %cst_35 = arith.constant dense<0.000000e+00> : vector<4x8xf32>
    %114 = vector.multi_reduction <add>, %113, %cst_35 [1] : vector<4x8x8xf32> to vector<4x8xf32>
    %115 = vector.shape_cast %114 : vector<4x8xf32> to vector<4x1x8xf32>
    %116 = math.log %115 : vector<4x1x8xf32>
    %117 = arith.addf %110, %116 : vector<4x1x8xf32>
    %118 = vector.broadcast %117 : vector<4x1x8xf32> to vector<4x8x8xf32>
    %119 = arith.subf %108, %118 : vector<4x8x8xf32>
    %cst_36 = arith.constant dense<0xFF800000> : vector<4x8xf32>
    %120 = vector.multi_reduction <maximumf>, %119, %cst_36 [2] : vector<4x8x8xf32> to vector<4x8xf32>
    %121 = vector.shape_cast %120 : vector<4x8xf32> to vector<4x8x1xf32>
    %122 = vector.broadcast %121 : vector<4x8x1xf32> to vector<4x8x8xf32>
    %123 = arith.subf %119, %122 : vector<4x8x8xf32>
    %124 = math.exp %123 : vector<4x8x8xf32>
    %cst_37 = arith.constant dense<0.000000e+00> : vector<4x8xf32>
    %125 = vector.multi_reduction <add>, %124, %cst_37 [2] : vector<4x8x8xf32> to vector<4x8xf32>
    %126 = vector.shape_cast %125 : vector<4x8xf32> to vector<4x8x1xf32>
    %127 = math.log %126 : vector<4x8x1xf32>
    %128 = arith.addf %121, %127 : vector<4x8x1xf32>
    %129 = vector.broadcast %128 : vector<4x8x1xf32> to vector<4x8x8xf32>
    %130 = arith.subf %119, %129 : vector<4x8x8xf32>
    %cst_38 = arith.constant dense<0xFF800000> : vector<4x8xf32>
    %131 = vector.multi_reduction <maximumf>, %130, %cst_38 [1] : vector<4x8x8xf32> to vector<4x8xf32>
    %132 = vector.shape_cast %131 : vector<4x8xf32> to vector<4x1x8xf32>
    %133 = vector.broadcast %132 : vector<4x1x8xf32> to vector<4x8x8xf32>
    %134 = arith.subf %130, %133 : vector<4x8x8xf32>
    %135 = math.exp %134 : vector<4x8x8xf32>
    %cst_39 = arith.constant dense<0.000000e+00> : vector<4x8xf32>
    %136 = vector.multi_reduction <add>, %135, %cst_39 [1] : vector<4x8x8xf32> to vector<4x8xf32>
    %137 = vector.shape_cast %136 : vector<4x8xf32> to vector<4x1x8xf32>
    %138 = math.log %137 : vector<4x1x8xf32>
    %139 = arith.addf %132, %138 : vector<4x1x8xf32>
    %140 = vector.broadcast %139 : vector<4x1x8xf32> to vector<4x8x8xf32>
    %141 = arith.subf %130, %140 : vector<4x8x8xf32>
    %cst_40 = arith.constant dense<0xFF800000> : vector<4x8xf32>
    %142 = vector.multi_reduction <maximumf>, %141, %cst_40 [2] : vector<4x8x8xf32> to vector<4x8xf32>
    %143 = vector.shape_cast %142 : vector<4x8xf32> to vector<4x8x1xf32>
    %144 = vector.broadcast %143 : vector<4x8x1xf32> to vector<4x8x8xf32>
    %145 = arith.subf %141, %144 : vector<4x8x8xf32>
    %146 = math.exp %145 : vector<4x8x8xf32>
    %cst_41 = arith.constant dense<0.000000e+00> : vector<4x8xf32>
    %147 = vector.multi_reduction <add>, %146, %cst_41 [2] : vector<4x8x8xf32> to vector<4x8xf32>
    %148 = vector.shape_cast %147 : vector<4x8xf32> to vector<4x8x1xf32>
    %149 = math.log %148 : vector<4x8x1xf32>
    %150 = arith.addf %143, %149 : vector<4x8x1xf32>
    %151 = vector.broadcast %150 : vector<4x8x1xf32> to vector<4x8x8xf32>
    %152 = arith.subf %141, %151 : vector<4x8x8xf32>
    %cst_42 = arith.constant dense<0xFF800000> : vector<4x8xf32>
    %153 = vector.multi_reduction <maximumf>, %152, %cst_42 [1] : vector<4x8x8xf32> to vector<4x8xf32>
    %154 = vector.shape_cast %153 : vector<4x8xf32> to vector<4x1x8xf32>
    %155 = vector.broadcast %154 : vector<4x1x8xf32> to vector<4x8x8xf32>
    %156 = arith.subf %152, %155 : vector<4x8x8xf32>
    %157 = math.exp %156 : vector<4x8x8xf32>
    %cst_43 = arith.constant dense<0.000000e+00> : vector<4x8xf32>
    %158 = vector.multi_reduction <add>, %157, %cst_43 [1] : vector<4x8x8xf32> to vector<4x8xf32>
    %159 = vector.shape_cast %158 : vector<4x8xf32> to vector<4x1x8xf32>
    %160 = math.log %159 : vector<4x1x8xf32>
    %161 = arith.addf %154, %160 : vector<4x1x8xf32>
    %162 = vector.broadcast %161 : vector<4x1x8xf32> to vector<4x8x8xf32>
    %163 = arith.subf %152, %162 : vector<4x8x8xf32>
    %cst_44 = arith.constant dense<0xFF800000> : vector<4x8xf32>
    %164 = vector.multi_reduction <maximumf>, %163, %cst_44 [2] : vector<4x8x8xf32> to vector<4x8xf32>
    %165 = vector.shape_cast %164 : vector<4x8xf32> to vector<4x8x1xf32>
    %166 = vector.broadcast %165 : vector<4x8x1xf32> to vector<4x8x8xf32>
    %167 = arith.subf %163, %166 : vector<4x8x8xf32>
    %168 = math.exp %167 : vector<4x8x8xf32>
    %cst_45 = arith.constant dense<0.000000e+00> : vector<4x8xf32>
    %169 = vector.multi_reduction <add>, %168, %cst_45 [2] : vector<4x8x8xf32> to vector<4x8xf32>
    %170 = vector.shape_cast %169 : vector<4x8xf32> to vector<4x8x1xf32>
    %171 = math.log %170 : vector<4x8x1xf32>
    %172 = arith.addf %165, %171 : vector<4x8x1xf32>
    %173 = vector.broadcast %172 : vector<4x8x1xf32> to vector<4x8x8xf32>
    %174 = arith.subf %163, %173 : vector<4x8x8xf32>
    %cst_46 = arith.constant dense<0xFF800000> : vector<4x8xf32>
    %175 = vector.multi_reduction <maximumf>, %174, %cst_46 [1] : vector<4x8x8xf32> to vector<4x8xf32>
    %176 = vector.shape_cast %175 : vector<4x8xf32> to vector<4x1x8xf32>
    %177 = vector.broadcast %176 : vector<4x1x8xf32> to vector<4x8x8xf32>
    %178 = arith.subf %174, %177 : vector<4x8x8xf32>
    %179 = math.exp %178 : vector<4x8x8xf32>
    %cst_47 = arith.constant dense<0.000000e+00> : vector<4x8xf32>
    %180 = vector.multi_reduction <add>, %179, %cst_47 [1] : vector<4x8x8xf32> to vector<4x8xf32>
    %181 = vector.shape_cast %180 : vector<4x8xf32> to vector<4x1x8xf32>
    %182 = math.log %181 : vector<4x1x8xf32>
    %183 = arith.addf %176, %182 : vector<4x1x8xf32>
    %184 = vector.broadcast %183 : vector<4x1x8xf32> to vector<4x8x8xf32>
    %185 = arith.subf %174, %184 : vector<4x8x8xf32>
    %cst_48 = arith.constant dense<0xFF800000> : vector<4x8xf32>
    %186 = vector.multi_reduction <maximumf>, %185, %cst_48 [2] : vector<4x8x8xf32> to vector<4x8xf32>
    %187 = vector.shape_cast %186 : vector<4x8xf32> to vector<4x8x1xf32>
    %188 = vector.broadcast %187 : vector<4x8x1xf32> to vector<4x8x8xf32>
    %189 = arith.subf %185, %188 : vector<4x8x8xf32>
    %190 = math.exp %189 : vector<4x8x8xf32>
    %cst_49 = arith.constant dense<0.000000e+00> : vector<4x8xf32>
    %191 = vector.multi_reduction <add>, %190, %cst_49 [2] : vector<4x8x8xf32> to vector<4x8xf32>
    %192 = vector.shape_cast %191 : vector<4x8xf32> to vector<4x8x1xf32>
    %193 = math.log %192 : vector<4x8x1xf32>
    %194 = arith.addf %187, %193 : vector<4x8x1xf32>
    %195 = vector.broadcast %194 : vector<4x8x1xf32> to vector<4x8x8xf32>
    %196 = arith.subf %185, %195 : vector<4x8x8xf32>
    %cst_50 = arith.constant dense<0xFF800000> : vector<4x8xf32>
    %197 = vector.multi_reduction <maximumf>, %196, %cst_50 [1] : vector<4x8x8xf32> to vector<4x8xf32>
    %198 = vector.shape_cast %197 : vector<4x8xf32> to vector<4x1x8xf32>
    %199 = vector.broadcast %198 : vector<4x1x8xf32> to vector<4x8x8xf32>
    %200 = arith.subf %196, %199 : vector<4x8x8xf32>
    %201 = math.exp %200 : vector<4x8x8xf32>
    %cst_51 = arith.constant dense<0.000000e+00> : vector<4x8xf32>
    %202 = vector.multi_reduction <add>, %201, %cst_51 [1] : vector<4x8x8xf32> to vector<4x8xf32>
    %203 = vector.shape_cast %202 : vector<4x8xf32> to vector<4x1x8xf32>
    %204 = math.log %203 : vector<4x1x8xf32>
    %205 = arith.addf %198, %204 : vector<4x1x8xf32>
    %206 = vector.broadcast %205 : vector<4x1x8xf32> to vector<4x8x8xf32>
    %207 = arith.subf %196, %206 : vector<4x8x8xf32>
    %208 = math.exp %207 : vector<4x8x8xf32>
    %c0_52 = arith.constant 0 : index
    %c0_53 = arith.constant 0 : index
    %c0_54 = arith.constant 0 : index
    %209 = vector.load %arg4[%c0_52, %c0_53, %c0_54] : memref<4x8x8xf32, #tpu.memory_space<vmem>>, vector<4x8x8xf32>
    tpu.vector_store %arg4[%c0_52, %c0_53, %c0_54], %208 {strides = array<i32>} : memref<4x8x8xf32, #tpu.memory_space<vmem>>, vector<4x8x8xf32>,
    return
  }
  func.func @transform_0(%arg0: i32) -> (i32, i32, i32) {
    %c0_i32 = arith.constant 0 : i32
    %c0_i32_0 = arith.constant 0 : i32
    %c0_i32_1 = arith.constant 0 : i32
    return %arg0, %c0_i32, %c0_i32_0 : i32, i32, i32
  }
  func.func @transform_1(%arg0: i32) -> (i32, i32, i32) {
    %c0_i32 = arith.constant 0 : i32
    %c0_i32_0 = arith.constant 0 : i32
    %c0_i32_1 = arith.constant 0 : i32
    return %arg0, %c0_i32, %c0_i32_0 : i32, i32, i32
  }
  func.func @transform_2(%arg0: i32) -> (i32, i32, i32) {
    %c0_i32 = arith.constant 0 : i32
    %c0_i32_0 = arith.constant 0 : i32
    %c0_i32_1 = arith.constant 0 : i32
    return %arg0, %c0_i32, %c0_i32_0 : i32, i32, i32
  }
  func.func @transform_3(%arg0: i32) -> (i32, i32, i32) {
    %c0_i32 = arith.constant 0 : i32
    %c0_i32_0 = arith.constant 0 : i32
    %c0_i32_1 = arith.constant 0 : i32
    return %arg0, %c0_i32, %c0_i32_0 : i32, i32, i32
  }
}

</mosaic_0001>

<llo_original>
// kernel: tpu_custom_call.1
$region0: #{tpu_custom_call.1}
  #allocation0 [shape = 'u32[]', space=smem, size = 0x4, offset = 0x4, fixed_abs, tag = 'smem constant byte address 0x4 - core index']
  #allocation1 [shape = 'u32[144,128]{1,0:T(1,128)}', space=vmem, size = 0x12000, scoped, tag = 'internal scratch']
  %s0 = inlined_call_operand.vmem [shape: f32[8,64,32], index: 0, kind: input, shape index: {}]
  %s1 = inlined_call_operand.vmem [shape: f32[8,64,32], index: 1, kind: input, shape index: {}]
  %s2 = inlined_call_operand.vmem [shape: f32[8,8,8], index: 2, kind: input, shape index: {}]
  %s3 = inlined_call_operand.hbm [shape: f32[8,8,8], index: 3, kind: output, shape index: {}]
  %s4 = sld [smem:[#allocation0]]
  $region45: #{tpu_custom_call.1} parent=0
    _
  %s6 = ssub.s32 1, %s4
  %s7 = scalar_select 0, %s6, %s4
  $region1: #{tpu_custom_call.1} parent=0
    #allocation2 [shape = 'u8[32768]{0}', space=vmem, size = 0x8000, scoped, tag = 'output window, operand 0']
    #allocation3 [shape = 's32[2]{0}', space=sflag, size = 0x8, scoped, tag = 'scoped memory for tpu_custom_call.1']
    %8 = vsyncpa [#allocation3], 0
    %s9 = scalar_lea.sflag [#allocation3], 1
    %10 = vsyncpa %s9, 0
    loop: start=0, step=1, limit=4
    $region2: #{tpu_custom_call.1} parent=1 // loop_pre_header
      _
    $region3: #{tpu_custom_call.1} parent=1 // loop_header
      %s12 = sphi 0, %s16
      %p13 = scmp.ge.s32.totalorder %s12, 4
      %s22 = sphi 0, %s24
      %s25 = sphi 0, %s22
      %s26 = sphi 0, %s25
      %s42 = sphi 0, %s26
      %s48 = sphi 0, %s50
      %s51 = sphi 0, %s48
      %s52 = sphi 0, %s51
      %s68 = sphi 0, %s52
      %s74 = sphi 0, %s76
      %s77 = sphi 0, %s74
      %s78 = sphi 0, %s77
      %s94 = sphi 0, %s78
      %s100 = sphi 0, %s102
      %s103 = sphi 0, %s100
      %s104 = sphi 0, %s103
      %s120 = sphi 0, %s104
    $region4: #{tpu_custom_call.1} parent=1 // loop_header_branch
      %15 = sbr.rel (%p13) target = $region8
    $region5: #{tpu_custom_call.1} parent=1 // loop_body
      %s17 = ssub.s32 %s12, 1
      %s18 = ssub.s32 %s12, 2
      %s19 = sadd.s32 %s12, 1
      %s20 = ssub.s32 %s12, %s19
      %p21 = scmp.eq.s32.totalorder %s20, 0
      %s23 = sadd.s32 %s22, 1
      %s24 = scalar_select %p21, %s22, %s23
      %p27 = pneg %p21
      %p28 = scmp.eq.s32.totalorder %s12, 1
      %p29 = por %p27, %p28
      %p30 = scmp.ne.s32.totalorder %s22, %s25
      %p31 = scmp.eq.s32.totalorder %s12, 0
      %p32 = por %p30, %p31
      %p33 = scmp.ne.s32.totalorder %s22, %s25
      %p34 = scmp.eq.s32.totalorder %s17, 1
      %p35 = por %p33, %p34
      %p36 = scmp.ne.s32.totalorder %s25, %s26
      %p37 = scmp.eq.s32.totalorder %s17, 0
      %p38 = por %p36, %p37
      %p39 = scmp.ne.s32.totalorder %s25, %s26
      %p40 = scmp.eq.s32.totalorder %s18, 1
      %p41 = por %p39, %p40
      %p43 = scmp.ne.s32.totalorder %s26, %s42
      %p44 = scmp.eq.s32.totalorder %s18, 0
      %p45 = por %p43, %p44
      %s46 = ssub.s32 %s12, %s19
      %p47 = scmp.eq.s32.totalorder %s46, 0
      %s49 = sadd.s32 %s48, 1
      %s50 = scalar_select %p47, %s48, %s49
      %p53 = pneg %p47
      %p54 = scmp.eq.s32.totalorder %s12, 1
      %p55 = por %p53, %p54
      %p56 = scmp.ne.s32.totalorder %s48, %s51
      %p57 = scmp.eq.s32.totalorder %s12, 0
      %p58 = por %p56, %p57
      %p59 = scmp.ne.s32.totalorder %s48, %s51
      %p60 = scmp.eq.s32.totalorder %s17, 1
      %p61 = por %p59, %p60
      %p62 = scmp.ne.s32.totalorder %s51, %s52
      %p63 = scmp.eq.s32.totalorder %s17, 0
      %p64 = por %p62, %p63
      %p65 = scmp.ne.s32.totalorder %s51, %s52
      %p66 = scmp.eq.s32.totalorder %s18, 1
      %p67 = por %p65, %p66
      %p69 = scmp.ne.s32.totalorder %s52, %s68
      %p70 = scmp.eq.s32.totalorder %s18, 0
      %p71 = por %p69, %p70
      %s72 = ssub.s32 %s12, %s19
      %p73 = scmp.eq.s32.totalorder %s72, 0
      %s75 = sadd.s32 %s74, 1
      %s76 = scalar_select %p73, %s74, %s75
      %p79 = pneg %p73
      %p80 = scmp.eq.s32.totalorder %s12, 1
      %p81 = por %p79, %p80
      %p82 = scmp.ne.s32.totalorder %s74, %s77
      %p83 = scmp.eq.s32.totalorder %s12, 0
      %p84 = por %p82, %p83
      %p85 = scmp.ne.s32.totalorder %s74, %s77
      %p86 = scmp.eq.s32.totalorder %s17, 1
      %p87 = por %p85, %p86
      %p88 = scmp.ne.s32.totalorder %s77, %s78
      %p89 = scmp.eq.s32.totalorder %s17, 0
      %p90 = por %p88, %p89
      %p91 = scmp.ne.s32.totalorder %s77, %s78
      %p92 = scmp.eq.s32.totalorder %s18, 1
      %p93 = por %p91, %p92
      %p95 = scmp.ne.s32.totalorder %s78, %s94
      %p96 = scmp.eq.s32.totalorder %s18, 0
      %p97 = por %p95, %p96
      %s98 = ssub.s32 %s12, %s19
      %p99 = scmp.eq.s32.totalorder %s98, 0
      %s101 = sadd.s32 %s100, 1
      %s102 = scalar_select %p99, %s100, %s101
      %p105 = pneg %p99
      %p106 = scmp.eq.s32.totalorder %s12, 1
      %p107 = por %p105, %p106
      %p108 = scmp.ne.s32.totalorder %s100, %s103
      %p109 = scmp.eq.s32.totalorder %s12, 0
      %p110 = por %p108, %p109
      %p111 = scmp.ne.s32.totalorder %s100, %s103
      %p112 = scmp.eq.s32.totalorder %s17, 1
      %p113 = por %p111, %p112
      %p114 = scmp.ne.s32.totalorder %s103, %s104
      %p115 = scmp.eq.s32.totalorder %s17, 0
      %p116 = por %p114, %p115
      %p117 = scmp.ne.s32.totalorder %s103, %s104
      %p118 = scmp.eq.s32.totalorder %s18, 1
      %p119 = por %p117, %p118
      %p121 = scmp.ne.s32.totalorder %s104, %s120
      %p122 = scmp.eq.s32.totalorder %s18, 0
      %p123 = por %p121, %p122
      %p124 = scmp.le.s32.totalorder 1, %s12
      %p125 = scmp.lt.s32.totalorder %s12, 3
      %p126 = pnand %p124, %p125
      %p127 = pneg %p126
      // Predicated region
      $region9: #{tpu_custom_call.1} parent=5 // pred_check
        _
      $region10: #{tpu_custom_call.1} parent=5 // pred_check_branch
        %129 = sbr.rel (%p126) target = $region12
      $region11: #{tpu_custom_call.1} parent=5 // pred_region
        %s130 = ssub.s32 %s12, 1
      $region12: #{tpu_custom_call.1} parent=5 // pred_fallthru
        _
      %p131 = scmp.lt.s32.totalorder %s12, 2
      // Predicated region
      $region13: #{tpu_custom_call.1} parent=5 // pred_check
        %p132 = pneg %p131
      $region14: #{tpu_custom_call.1} parent=5 // pred_check_branch
        %134 = sbr.rel (%p132) target = $region16
      $region15: #{tpu_custom_call.1} parent=5 // pred_region
        // Predicated region
        $region17: #{tpu_custom_call.1} parent=15 // pred_check
          %p135 = pneg %p32
        $region18: #{tpu_custom_call.1} parent=15 // pred_check_branch
          %137 = sbr.rel (%p135) target = $region20
        $region19: #{tpu_custom_call.1} parent=15 // pred_region
          %s138 = smul.u32 4, %s12
          %p139 = scmp.lt.s32.totalorder %s138, 7
          %s140 = scalar_select %p139, %s138, 7
          %s141 = smul.addr %s140, 8
          %s142 = smul.addr %s141, 8
          %s143 = scalar_lea.vmem %s0, %s142
          %s144 = smul.u32 4, %s12
        $region20: #{tpu_custom_call.1} parent=15 // pred_fallthru
          _
        // Predicated region
        $region21: #{tpu_custom_call.1} parent=15 // pred_check
          %p145 = pneg %p58
        $region22: #{tpu_custom_call.1} parent=15 // pred_check_branch
          %147 = sbr.rel (%p145) target = $region24
        $region23: #{tpu_custom_call.1} parent=15 // pred_region
          %s148 = smul.u32 4, %s12
          %p149 = scmp.lt.s32.totalorder %s148, 7
          %s150 = scalar_select %p149, %s148, 7
          %s151 = smul.addr %s150, 8
          %s152 = smul.addr %s151, 8
          %s153 = scalar_lea.vmem %s1, %s152
          %s154 = smul.u32 4, %s12
        $region24: #{tpu_custom_call.1} parent=15 // pred_fallthru
          _
        // Predicated region
        $region25: #{tpu_custom_call.1} parent=15 // pred_check
          %p155 = pneg %p84
        $region26: #{tpu_custom_call.1} parent=15 // pred_check_branch
          %157 = sbr.rel (%p155) target = $region28
        $region27: #{tpu_custom_call.1} parent=15 // pred_region
          %s158 = smul.u32 4, %s12
          %p159 = scmp.lt.s32.totalorder %s158, 7
          %s160 = scalar_select %p159, %s158, 7
          %s161 = smul.addr %s160, 8
          %s162 = scalar_lea.vmem %s2, %s161
          %s163 = smul.u32 4, %s12
        $region28: #{tpu_custom_call.1} parent=15 // pred_fallthru
          _
      $region16: #{tpu_custom_call.1} parent=5 // pred_fallthru
        _
      %p164 = scmp.le.s32.totalorder 1, %s12
      %p165 = scmp.lt.s32.totalorder %s12, 3
      %p166 = pnand %p164, %p165
      %p167 = pneg %p166
      // Predicated region
      $region29: #{tpu_custom_call.1} parent=5 // pred_check
        _
      $region30: #{tpu_custom_call.1} parent=5 // pred_check_branch
        %169 = sbr.rel (%p166) target = $region32
      $region31: #{tpu_custom_call.1} parent=5 // pred_region
        %s170 = ssub.s32 %s12, 1
        %s171 = smul.u32 4, %s17
        %p172 = scmp.lt.s32.totalorder %s171, 7
        %s173 = scalar_select %p172, %s171, 7
        %s174 = smul.addr %s173, 8
        %s175 = smul.addr %s174, 8
        %s176 = scalar_lea.vmem %s0, %s175
        %p177 = pneg %p38
        %p178 = pneg %p35
        %s179 = smul.u32 4, %s17
        %p180 = scmp.lt.s32.totalorder %s179, 7
        %s181 = scalar_select %p180, %s179, 7
        %s182 = smul.addr %s181, 8
        %s183 = smul.addr %s182, 8
        %s184 = scalar_lea.vmem %s1, %s183
        %p185 = pneg %p64
        %p186 = pneg %p61
        %s187 = smul.u32 4, %s17
        %p188 = scmp.lt.s32.totalorder %s187, 7
        %s189 = scalar_select %p188, %s187, 7
        %s190 = smul.addr %s189, 8
        %s191 = scalar_lea.vmem %s2, %s190
        %p192 = pneg %p90
        %p193 = pneg %p87
        %p194 = pneg %p116
        %p195 = pneg %p113
        %s196 = sand.u32 %s103, 1
        %s197 = scalar_lea.sflag [#allocation3], %s196
        %s198 = sand.u32 %s103, 1
        %s199 = smul.addr %s198, 32
        %s200 = scalar_lea.vmem [#allocation2], %s199
        %s201 = smul.u32 4, %s17
        %p202 = scmp.lt.s32.totalorder %s201, 7
        %s203 = scalar_select %p202, %s201, 7
        %s204 = smul.addr %s203, 8
        %s205 = smul.addr %s204, 8
        %s206 = scalar_lea.vmem %s0, %s205
        %s207 = smul.u32 4, %s17
        %s208 = smul.u32 4, %s17
        %p209 = scmp.lt.s32.totalorder %s208, 7
        %s210 = scalar_select %p209, %s208, 7
        %s211 = smul.addr %s210, 8
        %s212 = smul.addr %s211, 8
        %s213 = scalar_lea.vmem %s1, %s212
        %s214 = smul.u32 4, %s17
        %s215 = smul.u32 4, %s17
        %p216 = scmp.lt.s32.totalorder %s215, 7
        %s217 = scalar_select %p216, %s215, 7
        %s218 = smul.addr %s217, 8
        %s219 = scalar_lea.vmem %s2, %s218
        %s220 = smul.u32 4, %s17
        %s221 = smul.u32 4, %s17
        %v222 = vld [vmem:[%s206] sm:$0xff]
        %v223 = vld [vmem:[%s206 + $0x8] sm:$0xff]
        %v224 = vld [vmem:[%s206 + $0x10] sm:$0xff]
        %v225 = vld [vmem:[%s206 + $0x18] sm:$0xff]
        %v226 = vld [vmem:[%s206 + $0x20] sm:$0xff]
        %v227 = vld [vmem:[%s206 + $0x28] sm:$0xff]
        %v228 = vld [vmem:[%s206 + $0x30] sm:$0xff]
        %v229 = vld [vmem:[%s206 + $0x38] sm:$0xff]
        %v230 = vld [vmem:[%s206 + $0x40] sm:$0xff]
        %v231 = vld [vmem:[%s206 + $0x48] sm:$0xff]
        %v232 = vld [vmem:[%s206 + $0x50] sm:$0xff]
        %v233 = vld [vmem:[%s206 + $0x58] sm:$0xff]
        %v234 = vld [vmem:[%s206 + $0x60] sm:$0xff]
        %v235 = vld [vmem:[%s206 + $0x68] sm:$0xff]
        %v236 = vld [vmem:[%s206 + $0x70] sm:$0xff]
        %v237 = vld [vmem:[%s206 + $0x78] sm:$0xff]
        %v238 = vld [vmem:[%s206 + $0x80] sm:$0xff]
        %v239 = vld [vmem:[%s206 + $0x88] sm:$0xff]
        %v240 = vld [vmem:[%s206 + $0x90] sm:$0xff]
        %v241 = vld [vmem:[%s206 + $0x98] sm:$0xff]
        %v242 = vld [vmem:[%s206 + $0xa0] sm:$0xff]
        %v243 = vld [vmem:[%s206 + $0xa8] sm:$0xff]
        %v244 = vld [vmem:[%s206 + $0xb0] sm:$0xff]
        %v245 = vld [vmem:[%s206 + $0xb8] sm:$0xff]
        %v246 = vld [vmem:[%s206 + $0xc0] sm:$0xff]
        %v247 = vld [vmem:[%s206 + $0xc8] sm:$0xff]
        %v248 = vld [vmem:[%s206 + $0xd0] sm:$0xff]
        %v249 = vld [vmem:[%s206 + $0xd8] sm:$0xff]
        %v250 = vld [vmem:[%s206 + $0xe0] sm:$0xff]
        %v251 = vld [vmem:[%s206 + $0xe8] sm:$0xff]
        %v252 = vld [vmem:[%s206 + $0xf0] sm:$0xff]
        %v253 = vld [vmem:[%s206 + $0xf8] sm:$0xff]
        %v254 = vld [vmem:[%s213] sm:$0xff]
        %v255 = vld [vmem:[%s213 + $0x8] sm:$0xff]
        %v256 = vld [vmem:[%s213 + $0x10] sm:$0xff]
        %v257 = vld [vmem:[%s213 + $0x18] sm:$0xff]
        %v258 = vld [vmem:[%s213 + $0x20] sm:$0xff]
        %v259 = vld [vmem:[%s213 + $0x28] sm:$0xff]
        %v260 = vld [vmem:[%s213 + $0x30] sm:$0xff]
        %v261 = vld [vmem:[%s213 + $0x38] sm:$0xff]
        %v262 = vld [vmem:[%s213 + $0x40] sm:$0xff]
        %v263 = vld [vmem:[%s213 + $0x48] sm:$0xff]
        %v264 = vld [vmem:[%s213 + $0x50] sm:$0xff]
        %v265 = vld [vmem:[%s213 + $0x58] sm:$0xff]
        %v266 = vld [vmem:[%s213 + $0x60] sm:$0xff]
        %v267 = vld [vmem:[%s213 + $0x68] sm:$0xff]
        %v268 = vld [vmem:[%s213 + $0x70] sm:$0xff]
        %v269 = vld [vmem:[%s213 + $0x78] sm:$0xff]
        %v270 = vld [vmem:[%s213 + $0x80] sm:$0xff]
        %v271 = vld [vmem:[%s213 + $0x88] sm:$0xff]
        %v272 = vld [vmem:[%s213 + $0x90] sm:$0xff]
        %v273 = vld [vmem:[%s213 + $0x98] sm:$0xff]
        %v274 = vld [vmem:[%s213 + $0xa0] sm:$0xff]
        %v275 = vld [vmem:[%s213 + $0xa8] sm:$0xff]
        %v276 = vld [vmem:[%s213 + $0xb0] sm:$0xff]
        %v277 = vld [vmem:[%s213 + $0xb8] sm:$0xff]
        %v278 = vld [vmem:[%s213 + $0xc0] sm:$0xff]
        %v279 = vld [vmem:[%s213 + $0xc8] sm:$0xff]
        %v280 = vld [vmem:[%s213 + $0xd0] sm:$0xff]
        %v281 = vld [vmem:[%s213 + $0xd8] sm:$0xff]
        %v282 = vld [vmem:[%s213 + $0xe0] sm:$0xff]
        %v283 = vld [vmem:[%s213 + $0xe8] sm:$0xff]
        %v284 = vld [vmem:[%s213 + $0xf0] sm:$0xff]
        %v285 = vld [vmem:[%s213 + $0xf8] sm:$0xff]
        %vm286 = vcmask 261120
        %v287 = vsel %vm286, %v222, 0.0
        %v288 = vrot.slane %v287, 4
        %v289 = vadd.f32 %v287, %v288
        %v290 = vrot.slane %v289, 2
        %v291 = vadd.f32 %v289, %v290
        %v292 = vrot.slane %v291, 1
        %v293 = vadd.f32 %v291, %v292
        %v294 = vsel %vm286, %v223, 0.0
        %v295 = vrot.slane %v294, 4
        %v296 = vadd.f32 %v294, %v295
        %v297 = vrot.slane %v296, 2
        %v298 = vadd.f32 %v296, %v297
        %v299 = vrot.slane %v298, 1
        %v300 = vadd.f32 %v298, %v299
        %v301 = vsel %vm286, %v224, 0.0
        %v302 = vrot.slane %v301, 4
        %v303 = vadd.f32 %v301, %v302
        %v304 = vrot.slane %v303, 2
        %v305 = vadd.f32 %v303, %v304
        %v306 = vrot.slane %v305, 1
        %v307 = vadd.f32 %v305, %v306
        %v308 = vsel %vm286, %v225, 0.0
        %v309 = vrot.slane %v308, 4
        %v310 = vadd.f32 %v308, %v309
        %v311 = vrot.slane %v310, 2
        %v312 = vadd.f32 %v310, %v311
        %v313 = vrot.slane %v312, 1
        %v314 = vadd.f32 %v312, %v313
        %v315 = vsel %vm286, %v226, 0.0
        %v316 = vrot.slane %v315, 4
        %v317 = vadd.f32 %v315, %v316
        %v318 = vrot.slane %v317, 2
        %v319 = vadd.f32 %v317, %v318
        %v320 = vrot.slane %v319, 1
        %v321 = vadd.f32 %v319, %v320
        %v322 = vsel %vm286, %v227, 0.0
        %v323 = vrot.slane %v322, 4
        %v324 = vadd.f32 %v322, %v323
        %v325 = vrot.slane %v324, 2
        %v326 = vadd.f32 %v324, %v325
        %v327 = vrot.slane %v326, 1
        %v328 = vadd.f32 %v326, %v327
        %v329 = vsel %vm286, %v228, 0.0
        %v330 = vrot.slane %v329, 4
        %v331 = vadd.f32 %v329, %v330
        %v332 = vrot.slane %v331, 2
        %v333 = vadd.f32 %v331, %v332
        %v334 = vrot.slane %v333, 1
        %v335 = vadd.f32 %v333, %v334
        %v336 = vsel %vm286, %v229, 0.0
        %v337 = vrot.slane %v336, 4
        %v338 = vadd.f32 %v336, %v337
        %v339 = vrot.slane %v338, 2
        %v340 = vadd.f32 %v338, %v339
        %v341 = vrot.slane %v340, 1
        %v342 = vadd.f32 %v340, %v341
        %v343 = vsel %vm286, %v230, 0.0
        %v344 = vrot.slane %v343, 4
        %v345 = vadd.f32 %v343, %v344
        %v346 = vrot.slane %v345, 2
        %v347 = vadd.f32 %v345, %v346
        %v348 = vrot.slane %v347, 1
        %v349 = vadd.f32 %v347, %v348
        %v350 = vsel %vm286, %v231, 0.0
        %v351 = vrot.slane %v350, 4
        %v352 = vadd.f32 %v350, %v351
        %v353 = vrot.slane %v352, 2
        %v354 = vadd.f32 %v352, %v353
        %v355 = vrot.slane %v354, 1
        %v356 = vadd.f32 %v354, %v355
        %v357 = vsel %vm286, %v232, 0.0
        %v358 = vrot.slane %v357, 4
        %v359 = vadd.f32 %v357, %v358
        %v360 = vrot.slane %v359, 2
        %v361 = vadd.f32 %v359, %v360
        %v362 = vrot.slane %v361, 1
        %v363 = vadd.f32 %v361, %v362
        %v364 = vsel %vm286, %v233, 0.0
        %v365 = vrot.slane %v364, 4
        %v366 = vadd.f32 %v364, %v365
        %v367 = vrot.slane %v366, 2
        %v368 = vadd.f32 %v366, %v367
        %v369 = vrot.slane %v368, 1
        %v370 = vadd.f32 %v368, %v369
        %v371 = vsel %vm286, %v234, 0.0
        %v372 = vrot.slane %v371, 4
        %v373 = vadd.f32 %v371, %v372
        %v374 = vrot.slane %v373, 2
        %v375 = vadd.f32 %v373, %v374
        %v376 = vrot.slane %v375, 1
        %v377 = vadd.f32 %v375, %v376
        %v378 = vsel %vm286, %v235, 0.0
        %v379 = vrot.slane %v378, 4
        %v380 = vadd.f32 %v378, %v379
        %v381 = vrot.slane %v380, 2
        %v382 = vadd.f32 %v380, %v381
        %v383 = vrot.slane %v382, 1
        %v384 = vadd.f32 %v382, %v383
        %v385 = vsel %vm286, %v236, 0.0
        %v386 = vrot.slane %v385, 4
        %v387 = vadd.f32 %v385, %v386
        %v388 = vrot.slane %v387, 2
        %v389 = vadd.f32 %v387, %v388
        %v390 = vrot.slane %v389, 1
        %v391 = vadd.f32 %v389, %v390
        %v392 = vsel %vm286, %v237, 0.0
        %v393 = vrot.slane %v392, 4
        %v394 = vadd.f32 %v392, %v393
        %v395 = vrot.slane %v394, 2
        %v396 = vadd.f32 %v394, %v395
        %v397 = vrot.slane %v396, 1
        %v398 = vadd.f32 %v396, %v397
        %v399 = vsel %vm286, %v238, 0.0
        %v400 = vrot.slane %v399, 4
        %v401 = vadd.f32 %v399, %v400
        %v402 = vrot.slane %v401, 2
        %v403 = vadd.f32 %v401, %v402
        %v404 = vrot.slane %v403, 1
        %v405 = vadd.f32 %v403, %v404
        %v406 = vsel %vm286, %v239, 0.0
        %v407 = vrot.slane %v406, 4
        %v408 = vadd.f32 %v406, %v407
        %v409 = vrot.slane %v408, 2
        %v410 = vadd.f32 %v408, %v409
        %v411 = vrot.slane %v410, 1
        %v412 = vadd.f32 %v410, %v411
        %v413 = vsel %vm286, %v240, 0.0
        %v414 = vrot.slane %v413, 4
        %v415 = vadd.f32 %v413, %v414
        %v416 = vrot.slane %v415, 2
        %v417 = vadd.f32 %v415, %v416
        %v418 = vrot.slane %v417, 1
        %v419 = vadd.f32 %v417, %v418
        %v420 = vsel %vm286, %v241, 0.0
        %v421 = vrot.slane %v420, 4
        %v422 = vadd.f32 %v420, %v421
        %v423 = vrot.slane %v422, 2
        %v424 = vadd.f32 %v422, %v423
        %v425 = vrot.slane %v424, 1
        %v426 = vadd.f32 %v424, %v425
        %v427 = vsel %vm286, %v242, 0.0
        %v428 = vrot.slane %v427, 4
        %v429 = vadd.f32 %v427, %v428
        %v430 = vrot.slane %v429, 2
        %v431 = vadd.f32 %v429, %v430
        %v432 = vrot.slane %v431, 1
        %v433 = vadd.f32 %v431, %v432
        %v434 = vsel %vm286, %v243, 0.0
        %v435 = vrot.slane %v434, 4
        %v436 = vadd.f32 %v434, %v435
        %v437 = vrot.slane %v436, 2
        %v438 = vadd.f32 %v436, %v437
        %v439 = vrot.slane %v438, 1
        %v440 = vadd.f32 %v438, %v439
        %v441 = vsel %vm286, %v244, 0.0
        %v442 = vrot.slane %v441, 4
        %v443 = vadd.f32 %v441, %v442
        %v444 = vrot.slane %v443, 2
        %v445 = vadd.f32 %v443, %v444
        %v446 = vrot.slane %v445, 1
        %v447 = vadd.f32 %v445, %v446
        %v448 = vsel %vm286, %v245, 0.0
        %v449 = vrot.slane %v448, 4
        %v450 = vadd.f32 %v448, %v449
        %v451 = vrot.slane %v450, 2
        %v452 = vadd.f32 %v450, %v451
        %v453 = vrot.slane %v452, 1
        %v454 = vadd.f32 %v452, %v453
        %v455 = vsel %vm286, %v246, 0.0
        %v456 = vrot.slane %v455, 4
        %v457 = vadd.f32 %v455, %v456
        %v458 = vrot.slane %v457, 2
        %v459 = vadd.f32 %v457, %v458
        %v460 = vrot.slane %v459, 1
        %v461 = vadd.f32 %v459, %v460
        %v462 = vsel %vm286, %v247, 0.0
        %v463 = vrot.slane %v462, 4
        %v464 = vadd.f32 %v462, %v463
        %v465 = vrot.slane %v464, 2
        %v466 = vadd.f32 %v464, %v465
        %v467 = vrot.slane %v466, 1
        %v468 = vadd.f32 %v466, %v467
        %v469 = vsel %vm286, %v248, 0.0
        %v470 = vrot.slane %v469, 4
        %v471 = vadd.f32 %v469, %v470
        %v472 = vrot.slane %v471, 2
        %v473 = vadd.f32 %v471, %v472
        %v474 = vrot.slane %v473, 1
        %v475 = vadd.f32 %v473, %v474
        %v476 = vsel %vm286, %v249, 0.0
        %v477 = vrot.slane %v476, 4
        %v478 = vadd.f32 %v476, %v477
        %v479 = vrot.slane %v478, 2
        %v480 = vadd.f32 %v478, %v479
        %v481 = vrot.slane %v480, 1
        %v482 = vadd.f32 %v480, %v481
        %v483 = vsel %vm286, %v250, 0.0
        %v484 = vrot.slane %v483, 4
        %v485 = vadd.f32 %v483, %v484
        %v486 = vrot.slane %v485, 2
        %v487 = vadd.f32 %v485, %v486
        %v488 = vrot.slane %v487, 1
        %v489 = vadd.f32 %v487, %v488
        %v490 = vsel %vm286, %v251, 0.0
        %v491 = vrot.slane %v490, 4
        %v492 = vadd.f32 %v490, %v491
        %v493 = vrot.slane %v492, 2
        %v494 = vadd.f32 %v492, %v493
        %v495 = vrot.slane %v494, 1
        %v496 = vadd.f32 %v494, %v495
        %v497 = vsel %vm286, %v252, 0.0
        %v498 = vrot.slane %v497, 4
        %v499 = vadd.f32 %v497, %v498
        %v500 = vrot.slane %v499, 2
        %v501 = vadd.f32 %v499, %v500
        %v502 = vrot.slane %v501, 1
        %v503 = vadd.f32 %v501, %v502
        %v504 = vsel %vm286, %v253, 0.0
        %v505 = vrot.slane %v504, 4
        %v506 = vadd.f32 %v504, %v505
        %v507 = vrot.slane %v506, 2
        %v508 = vadd.f32 %v506, %v507
        %v509 = vrot.slane %v508, 1
        %v510 = vadd.f32 %v508, %v509
        %v511 = vmul.f32 %v293, 0.125
        %v512 = vmul.f32 %v300, 0.125
        %v513 = vmul.f32 %v307, 0.125
        %v514 = vmul.f32 %v314, 0.125
        %v515 = vmul.f32 %v321, 0.125
        %v516 = vmul.f32 %v328, 0.125
        %v517 = vmul.f32 %v335, 0.125
        %v518 = vmul.f32 %v342, 0.125
        %v519 = vmul.f32 %v349, 0.125
        %v520 = vmul.f32 %v356, 0.125
        %v521 = vmul.f32 %v363, 0.125
        %v522 = vmul.f32 %v370, 0.125
        %v523 = vmul.f32 %v377, 0.125
        %v524 = vmul.f32 %v384, 0.125
        %v525 = vmul.f32 %v391, 0.125
        %v526 = vmul.f32 %v398, 0.125
        %v527 = vmul.f32 %v405, 0.125
        %v528 = vmul.f32 %v412, 0.125
        %v529 = vmul.f32 %v419, 0.125
        %v530 = vmul.f32 %v426, 0.125
        %v531 = vmul.f32 %v433, 0.125
        %v532 = vmul.f32 %v440, 0.125
        %v533 = vmul.f32 %v447, 0.125
        %v534 = vmul.f32 %v454, 0.125
        %v535 = vmul.f32 %v461, 0.125
        %v536 = vmul.f32 %v468, 0.125
        %v537 = vmul.f32 %v475, 0.125
        %v538 = vmul.f32 %v482, 0.125
        %v539 = vmul.f32 %v489, 0.125
        %v540 = vmul.f32 %v496, 0.125
        %v541 = vmul.f32 %v503, 0.125
        %v542 = vmul.f32 %v510, 0.125
        %v543 = vsel %vm286, %v254, 0.0
        %v544 = vrot.slane %v543, 4
        %v545 = vadd.f32 %v543, %v544
        %v546 = vrot.slane %v545, 2
        %v547 = vadd.f32 %v545, %v546
        %v548 = vrot.slane %v547, 1
        %v549 = vadd.f32 %v547, %v548
        %v550 = vsel %vm286, %v255, 0.0
        %v551 = vrot.slane %v550, 4
        %v552 = vadd.f32 %v550, %v551
        %v553 = vrot.slane %v552, 2
        %v554 = vadd.f32 %v552, %v553
        %v555 = vrot.slane %v554, 1
        %v556 = vadd.f32 %v554, %v555
        %v557 = vsel %vm286, %v256, 0.0
        %v558 = vrot.slane %v557, 4
        %v559 = vadd.f32 %v557, %v558
        %v560 = vrot.slane %v559, 2
        %v561 = vadd.f32 %v559, %v560
        %v562 = vrot.slane %v561, 1
        %v563 = vadd.f32 %v561, %v562
        %v564 = vsel %vm286, %v257, 0.0
        %v565 = vrot.slane %v564, 4
        %v566 = vadd.f32 %v564, %v565
        %v567 = vrot.slane %v566, 2
        %v568 = vadd.f32 %v566, %v567
        %v569 = vrot.slane %v568, 1
        %v570 = vadd.f32 %v568, %v569
        %v571 = vsel %vm286, %v258, 0.0
        %v572 = vrot.slane %v571, 4
        %v573 = vadd.f32 %v571, %v572
        %v574 = vrot.slane %v573, 2
        %v575 = vadd.f32 %v573, %v574
        %v576 = vrot.slane %v575, 1
        %v577 = vadd.f32 %v575, %v576
        %v578 = vsel %vm286, %v259, 0.0
        %v579 = vrot.slane %v578, 4
        %v580 = vadd.f32 %v578, %v579
        %v581 = vrot.slane %v580, 2
        %v582 = vadd.f32 %v580, %v581
        %v583 = vrot.slane %v582, 1
        %v584 = vadd.f32 %v582, %v583
        %v585 = vsel %vm286, %v260, 0.0
        %v586 = vrot.slane %v585, 4
        %v587 = vadd.f32 %v585, %v586
        %v588 = vrot.slane %v587, 2
        %v589 = vadd.f32 %v587, %v588
        %v590 = vrot.slane %v589, 1
        %v591 = vadd.f32 %v589, %v590
        %v592 = vsel %vm286, %v261, 0.0
        %v593 = vrot.slane %v592, 4
        %v594 = vadd.f32 %v592, %v593
        %v595 = vrot.slane %v594, 2
        %v596 = vadd.f32 %v594, %v595
        %v597 = vrot.slane %v596, 1
        %v598 = vadd.f32 %v596, %v597
        %v599 = vsel %vm286, %v262, 0.0
        %v600 = vrot.slane %v599, 4
        %v601 = vadd.f32 %v599, %v600
        %v602 = vrot.slane %v601, 2
        %v603 = vadd.f32 %v601, %v602
        %v604 = vrot.slane %v603, 1
        %v605 = vadd.f32 %v603, %v604
        %v606 = vsel %vm286, %v263, 0.0
        %v607 = vrot.slane %v606, 4
        %v608 = vadd.f32 %v606, %v607
        %v609 = vrot.slane %v608, 2
        %v610 = vadd.f32 %v608, %v609
        %v611 = vrot.slane %v610, 1
        %v612 = vadd.f32 %v610, %v611
        %v613 = vsel %vm286, %v264, 0.0
        %v614 = vrot.slane %v613, 4
        %v615 = vadd.f32 %v613, %v614
        %v616 = vrot.slane %v615, 2
        %v617 = vadd.f32 %v615, %v616
        %v618 = vrot.slane %v617, 1
        %v619 = vadd.f32 %v617, %v618
        %v620 = vsel %vm286, %v265, 0.0
        %v621 = vrot.slane %v620, 4
        %v622 = vadd.f32 %v620, %v621
        %v623 = vrot.slane %v622, 2
        %v624 = vadd.f32 %v622, %v623
        %v625 = vrot.slane %v624, 1
        %v626 = vadd.f32 %v624, %v625
        %v627 = vsel %vm286, %v266, 0.0
        %v628 = vrot.slane %v627, 4
        %v629 = vadd.f32 %v627, %v628
        %v630 = vrot.slane %v629, 2
        %v631 = vadd.f32 %v629, %v630
        %v632 = vrot.slane %v631, 1
        %v633 = vadd.f32 %v631, %v632
        %v634 = vsel %vm286, %v267, 0.0
        %v635 = vrot.slane %v634, 4
        %v636 = vadd.f32 %v634, %v635
        %v637 = vrot.slane %v636, 2
        %v638 = vadd.f32 %v636, %v637
        %v639 = vrot.slane %v638, 1
        %v640 = vadd.f32 %v638, %v639
        %v641 = vsel %vm286, %v268, 0.0
        %v642 = vrot.slane %v641, 4
        %v643 = vadd.f32 %v641, %v642
        %v644 = vrot.slane %v643, 2
        %v645 = vadd.f32 %v643, %v644
        %v646 = vrot.slane %v645, 1
        %v647 = vadd.f32 %v645, %v646
        %v648 = vsel %vm286, %v269, 0.0
        %v649 = vrot.slane %v648, 4
        %v650 = vadd.f32 %v648, %v649
        %v651 = vrot.slane %v650, 2
        %v652 = vadd.f32 %v650, %v651
        %v653 = vrot.slane %v652, 1
        %v654 = vadd.f32 %v652, %v653
        %v655 = vsel %vm286, %v270, 0.0
        %v656 = vrot.slane %v655, 4
        %v657 = vadd.f32 %v655, %v656
        %v658 = vrot.slane %v657, 2
        %v659 = vadd.f32 %v657, %v658
        %v660 = vrot.slane %v659, 1
        %v661 = vadd.f32 %v659, %v660
        %v662 = vsel %vm286, %v271, 0.0
        %v663 = vrot.slane %v662, 4
        %v664 = vadd.f32 %v662, %v663
        %v665 = vrot.slane %v664, 2
        %v666 = vadd.f32 %v664, %v665
        %v667 = vrot.slane %v666, 1
        %v668 = vadd.f32 %v666, %v667
        %v669 = vsel %vm286, %v272, 0.0
        %v670 = vrot.slane %v669, 4
        %v671 = vadd.f32 %v669, %v670
        %v672 = vrot.slane %v671, 2
        %v673 = vadd.f32 %v671, %v672
        %v674 = vrot.slane %v673, 1
        %v675 = vadd.f32 %v673, %v674
        %v676 = vsel %vm286, %v273, 0.0
        %v677 = vrot.slane %v676, 4
        %v678 = vadd.f32 %v676, %v677
        %v679 = vrot.slane %v678, 2
        %v680 = vadd.f32 %v678, %v679
        %v681 = vrot.slane %v680, 1
        %v682 = vadd.f32 %v680, %v681
        %v683 = vsel %vm286, %v274, 0.0
        %v684 = vrot.slane %v683, 4
        %v685 = vadd.f32 %v683, %v684
        %v686 = vrot.slane %v685, 2
        %v687 = vadd.f32 %v685, %v686
        %v688 = vrot.slane %v687, 1
        %v689 = vadd.f32 %v687, %v688
        %v690 = vsel %vm286, %v275, 0.0
        %v691 = vrot.slane %v690, 4
        %v692 = vadd.f32 %v690, %v691
        %v693 = vrot.slane %v692, 2
        %v694 = vadd.f32 %v692, %v693
        %v695 = vrot.slane %v694, 1
        %v696 = vadd.f32 %v694, %v695
        %v697 = vsel %vm286, %v276, 0.0
        %v698 = vrot.slane %v697, 4
        %v699 = vadd.f32 %v697, %v698
        %v700 = vrot.slane %v699, 2
        %v701 = vadd.f32 %v699, %v700
        %v702 = vrot.slane %v701, 1
        %v703 = vadd.f32 %v701, %v702
        %v704 = vsel %vm286, %v277, 0.0
        %v705 = vrot.slane %v704, 4
        %v706 = vadd.f32 %v704, %v705
        %v707 = vrot.slane %v706, 2
        %v708 = vadd.f32 %v706, %v707
        %v709 = vrot.slane %v708, 1
        %v710 = vadd.f32 %v708, %v709
        %v711 = vsel %vm286, %v278, 0.0
        %v712 = vrot.slane %v711, 4
        %v713 = vadd.f32 %v711, %v712
        %v714 = vrot.slane %v713, 2
        %v715 = vadd.f32 %v713, %v714
        %v716 = vrot.slane %v715, 1
        %v717 = vadd.f32 %v715, %v716
        %v718 = vsel %vm286, %v279, 0.0
        %v719 = vrot.slane %v718, 4
        %v720 = vadd.f32 %v718, %v719
        %v721 = vrot.slane %v720, 2
        %v722 = vadd.f32 %v720, %v721
        %v723 = vrot.slane %v722, 1
        %v724 = vadd.f32 %v722, %v723
        %v725 = vsel %vm286, %v280, 0.0
        %v726 = vrot.slane %v725, 4
        %v727 = vadd.f32 %v725, %v726
        %v728 = vrot.slane %v727, 2
        %v729 = vadd.f32 %v727, %v728
        %v730 = vrot.slane %v729, 1
        %v731 = vadd.f32 %v729, %v730
        %v732 = vsel %vm286, %v281, 0.0
        %v733 = vrot.slane %v732, 4
        %v734 = vadd.f32 %v732, %v733
        %v735 = vrot.slane %v734, 2
        %v736 = vadd.f32 %v734, %v735
        %v737 = vrot.slane %v736, 1
        %v738 = vadd.f32 %v736, %v737
        %v739 = vsel %vm286, %v282, 0.0
        %v740 = vrot.slane %v739, 4
        %v741 = vadd.f32 %v739, %v740
        %v742 = vrot.slane %v741, 2
        %v743 = vadd.f32 %v741, %v742
        %v744 = vrot.slane %v743, 1
        %v745 = vadd.f32 %v743, %v744
        %v746 = vsel %vm286, %v283, 0.0
        %v747 = vrot.slane %v746, 4
        %v748 = vadd.f32 %v746, %v747
        %v749 = vrot.slane %v748, 2
        %v750 = vadd.f32 %v748, %v749
        %v751 = vrot.slane %v750, 1
        %v752 = vadd.f32 %v750, %v751
        %v753 = vsel %vm286, %v284, 0.0
        %v754 = vrot.slane %v753, 4
        %v755 = vadd.f32 %v753, %v754
        %v756 = vrot.slane %v755, 2
        %v757 = vadd.f32 %v755, %v756
        %v758 = vrot.slane %v757, 1
        %v759 = vadd.f32 %v757, %v758
        %v760 = vsel %vm286, %v285, 0.0
        %v761 = vrot.slane %v760, 4
        %v762 = vadd.f32 %v760, %v761
        %v763 = vrot.slane %v762, 2
        %v764 = vadd.f32 %v762, %v763
        %v765 = vrot.slane %v764, 1
        %v766 = vadd.f32 %v764, %v765
        %v767 = vmul.f32 %v549, 0.125
        %v768 = vmul.f32 %v556, 0.125
        %v769 = vmul.f32 %v563, 0.125
        %v770 = vmul.f32 %v570, 0.125
        %v771 = vmul.f32 %v577, 0.125
        %v772 = vmul.f32 %v584, 0.125
        %v773 = vmul.f32 %v591, 0.125
        %v774 = vmul.f32 %v598, 0.125
        %v775 = vmul.f32 %v605, 0.125
        %v776 = vmul.f32 %v612, 0.125
        %v777 = vmul.f32 %v619, 0.125
        %v778 = vmul.f32 %v626, 0.125
        %v779 = vmul.f32 %v633, 0.125
        %v780 = vmul.f32 %v640, 0.125
        %v781 = vmul.f32 %v647, 0.125
        %v782 = vmul.f32 %v654, 0.125
        %v783 = vmul.f32 %v661, 0.125
        %v784 = vmul.f32 %v668, 0.125
        %v785 = vmul.f32 %v675, 0.125
        %v786 = vmul.f32 %v682, 0.125
        %v787 = vmul.f32 %v689, 0.125
        %v788 = vmul.f32 %v696, 0.125
        %v789 = vmul.f32 %v703, 0.125
        %v790 = vmul.f32 %v710, 0.125
        %v791 = vmul.f32 %v717, 0.125
        %v792 = vmul.f32 %v724, 0.125
        %v793 = vmul.f32 %v731, 0.125
        %v794 = vmul.f32 %v738, 0.125
        %v795 = vmul.f32 %v745, 0.125
        %v796 = vmul.f32 %v752, 0.125
        %v797 = vmul.f32 %v759, 0.125
        %v798 = vmul.f32 %v766, 0.125
        %vm807 = vcmask 1041409
        %v808 = vsel %vm807, %v512, %v511
        %vm809 = vcmask 1042434
        %v810 = vsel %vm809, %v513, %v808
        %vm811 = vcmask 1043459
        %v812 = vsel %vm811, %v514, %v810
        %vm813 = vcmask 1044484
        %v814 = vsel %vm813, %v515, %v812
        %vm815 = vcmask 1045509
        %v816 = vsel %vm815, %v516, %v814
        %vm817 = vcmask 1046534
        %v818 = vsel %vm817, %v517, %v816
        %vm819 = vcmask 1047559
        %v820 = vsel %vm819, %v518, %v818
        %v829 = vsel %vm807, %v768, %v767
        %v830 = vsel %vm809, %v769, %v829
        %v831 = vsel %vm811, %v770, %v830
        %v832 = vsel %vm813, %v771, %v831
        %v833 = vsel %vm815, %v772, %v832
        %v834 = vsel %vm817, %v773, %v833
        %v835 = vsel %vm819, %v774, %v834
        %v836 = vsel %vm286, %v820, 0
        %v838 = vsel %vm286, %v835, 0
        %840 = vmatprep.subr.mxu0 0.0
        %841 = vmatpush1.xpose.msra.mxu0 %v838
        %842 = vmatprep.subr.mxu0 0.0
        %843 = vmatpush1.xpose.msra.mxu0 0.0
        %844 = vmatprep.subr.mxu0 0.0
        %845 = vmatpush1.xpose.msra.mxu0 0.0
        %846 = vmatprep.subr.mxu0 0.0
        %847 = vmatpush1.xpose.msra.mxu0 0.0
        %848 = vmatprep.subr.mxu0 0.0
        %849 = vmatpush1.xpose.msra.mxu0 0.0
        %850 = vmatprep.subr.mxu0 0.0
        %851 = vmatpush1.xpose.msra.mxu0 0.0
        %852 = vmatprep.subr.mxu0 0.0
        %853 = vmatpush1.xpose.msra.mxu0 0.0
        %854 = vmatprep.subr.mxu0 0.0
        %855 = vmatpush1.xpose.msra.mxu0 0.0
        %856 = vmatprep.subr.mxu0 0.0
        %857 = vmatpush1.xpose.msra.mxu0 0.0
        %858 = vmatprep.subr.mxu0 0.0
        %859 = vmatpush1.xpose.msra.mxu0 0.0
        %860 = vmatprep.subr.mxu0 0.0
        %861 = vmatpush1.xpose.msra.mxu0 0.0
        %862 = vmatprep.subr.mxu0 0.0
        %863 = vmatpush1.xpose.msra.mxu0 0.0
        %864 = vmatprep.subr.mxu0 0.0
        %865 = vmatpush1.xpose.msra.mxu0 0.0
        %866 = vmatprep.subr.mxu0 0.0
        %867 = vmatpush1.xpose.msra.mxu0 0.0
        %868 = vmatprep.subr.mxu0 0.0
        %869 = vmatpush1.xpose.msra.mxu0 0.0
        %870 = vmatprep.subr.mxu0 0.0
        %871 = vmatpush1.xpose.msra.mxu0 0.0
        %872 = vmatprep.subr.mxu0 0.0
        %873 = vmatpush1.xpose.msra.mxu0 0.0
        %874 = vmatprep.subr.mxu0 0.0
        %875 = vmatpush1.xpose.msra.mxu0 0.0
        %876 = vmatprep.subr.mxu0 0.0
        %877 = vmatpush1.xpose.msra.mxu0 0.0
        %878 = vmatprep.subr.mxu0 0.0
        %879 = vmatpush1.xpose.msra.mxu0 0.0
        %880 = vmatprep.subr.mxu0 0.0
        %881 = vmatpush1.xpose.msra.mxu0 0.0
        %882 = vmatprep.subr.mxu0 0.0
        %883 = vmatpush1.xpose.msra.mxu0 0.0
        %884 = vmatprep.subr.mxu0 0.0
        %885 = vmatpush1.xpose.msra.mxu0 0.0
        %886 = vmatprep.subr.mxu0 0.0
        %887 = vmatpush1.xpose.msra.mxu0 0.0
        %888 = vmatprep.subr.mxu0 0.0
        %889 = vmatpush1.xpose.msra.mxu0 0.0
        %890 = vmatprep.subr.mxu0 0.0
        %891 = vmatpush1.xpose.msra.mxu0 0.0
        %892 = vmatprep.subr.mxu0 0.0
        %893 = vmatpush1.xpose.msra.mxu0 0.0
        %894 = vmatprep.subr.mxu0 0.0
        %895 = vmatpush1.xpose.msra.mxu0 0.0
        %896 = vmatprep.subr.mxu0 0.0
        %897 = vmatpush1.xpose.msra.mxu0 0.0
        %898 = vmatprep.subr.mxu0 0.0
        %899 = vmatpush1.xpose.msra.mxu0 0.0
        %900 = vmatprep.subr.mxu0 0.0
        %901 = vmatpush1.xpose.msra.mxu0 0.0
        %902 = vmatprep.subr.mxu0 0.0
        %903 = vmatpush1.xpose.msra.mxu0 0.0
        %904 = vmatprep.mubr.f32.mxu0 0.0
        %905 = vmatmul.mubr.f32.gmra.mrb[0].mxu0 %v836
        %v906 = vpop.f32.mrb[0].mxu0
        %v907 = vadd.f32 0.0, %v906
        %v908 = vpop.f32.mrb[0].mxu0
        %909 = vdwg.mxu0
        %v918 = vsel %vm807, %v520, %v519
        %v919 = vsel %vm809, %v521, %v918
        %v920 = vsel %vm811, %v522, %v919
        %v921 = vsel %vm813, %v523, %v920
        %v922 = vsel %vm815, %v524, %v921
        %v923 = vsel %vm817, %v525, %v922
        %v924 = vsel %vm819, %v526, %v923
        %v933 = vsel %vm807, %v776, %v775
        %v934 = vsel %vm809, %v777, %v933
        %v935 = vsel %vm811, %v778, %v934
        %v936 = vsel %vm813, %v779, %v935
        %v937 = vsel %vm815, %v780, %v936
        %v938 = vsel %vm817, %v781, %v937
        %v939 = vsel %vm819, %v782, %v938
        %v940 = vsel %vm286, %v924, 0
        %v942 = vsel %vm286, %v939, 0
        %944 = vmatprep.subr.mxu0 0.0
        %945 = vmatpush1.xpose.msra.mxu0 %v942
        %946 = vmatprep.subr.mxu0 0.0
        %947 = vmatpush1.xpose.msra.mxu0 0.0
        %948 = vmatprep.subr.mxu0 0.0
        %949 = vmatpush1.xpose.msra.mxu0 0.0
        %950 = vmatprep.subr.mxu0 0.0
        %951 = vmatpush1.xpose.msra.mxu0 0.0
        %952 = vmatprep.subr.mxu0 0.0
        %953 = vmatpush1.xpose.msra.mxu0 0.0
        %954 = vmatprep.subr.mxu0 0.0
        %955 = vmatpush1.xpose.msra.mxu0 0.0
        %956 = vmatprep.subr.mxu0 0.0
        %957 = vmatpush1.xpose.msra.mxu0 0.0
        %958 = vmatprep.subr.mxu0 0.0
        %959 = vmatpush1.xpose.msra.mxu0 0.0
        %960 = vmatprep.subr.mxu0 0.0
        %961 = vmatpush1.xpose.msra.mxu0 0.0
        %962 = vmatprep.subr.mxu0 0.0
        %963 = vmatpush1.xpose.msra.mxu0 0.0
        %964 = vmatprep.subr.mxu0 0.0
        %965 = vmatpush1.xpose.msra.mxu0 0.0
        %966 = vmatprep.subr.mxu0 0.0
        %967 = vmatpush1.xpose.msra.mxu0 0.0
        %968 = vmatprep.subr.mxu0 0.0
        %969 = vmatpush1.xpose.msra.mxu0 0.0
        %970 = vmatprep.subr.mxu0 0.0
        %971 = vmatpush1.xpose.msra.mxu0 0.0
        %972 = vmatprep.subr.mxu0 0.0
        %973 = vmatpush1.xpose.msra.mxu0 0.0
        %974 = vmatprep.subr.mxu0 0.0
        %975 = vmatpush1.xpose.msra.mxu0 0.0
        %976 = vmatprep.subr.mxu0 0.0
        %977 = vmatpush1.xpose.msra.mxu0 0.0
        %978 = vmatprep.subr.mxu0 0.0
        %979 = vmatpush1.xpose.msra.mxu0 0.0
        %980 = vmatprep.subr.mxu0 0.0
        %981 = vmatpush1.xpose.msra.mxu0 0.0
        %982 = vmatprep.subr.mxu0 0.0
        %983 = vmatpush1.xpose.msra.mxu0 0.0
        %984 = vmatprep.subr.mxu0 0.0
        %985 = vmatpush1.xpose.msra.mxu0 0.0
        %986 = vmatprep.subr.mxu0 0.0
        %987 = vmatpush1.xpose.msra.mxu0 0.0
        %988 = vmatprep.subr.mxu0 0.0
        %989 = vmatpush1.xpose.msra.mxu0 0.0
        %990 = vmatprep.subr.mxu0 0.0
        %991 = vmatpush1.xpose.msra.mxu0 0.0
        %992 = vmatprep.subr.mxu0 0.0
        %993 = vmatpush1.xpose.msra.mxu0 0.0
        %994 = vmatprep.subr.mxu0 0.0
        %995 = vmatpush1.xpose.msra.mxu0 0.0
        %996 = vmatprep.subr.mxu0 0.0
        %997 = vmatpush1.xpose.msra.mxu0 0.0
        %998 = vmatprep.subr.mxu0 0.0
        %999 = vmatpush1.xpose.msra.mxu0 0.0
        %1000 = vmatprep.subr.mxu0 0.0
        %1001 = vmatpush1.xpose.msra.mxu0 0.0
        %1002 = vmatprep.subr.mxu0 0.0
        %1003 = vmatpush1.xpose.msra.mxu0 0.0
        %1004 = vmatprep.subr.mxu0 0.0
        %1005 = vmatpush1.xpose.msra.mxu0 0.0
        %1006 = vmatprep.subr.mxu0 0.0
        %1007 = vmatpush1.xpose.msra.mxu0 0.0
        %1008 = vmatprep.mubr.f32.mxu0 0.0
        %1009 = vmatmul.mubr.f32.gmra.mrb[0].mxu0 %v940
        %v1010 = vpop.f32.mrb[0].mxu0
        %v1011 = vadd.f32 0.0, %v1010
        %v1012 = vpop.f32.mrb[0].mxu0
        %1013 = vdwg.mxu0
        %v1022 = vsel %vm807, %v528, %v527
        %v1023 = vsel %vm809, %v529, %v1022
        %v1024 = vsel %vm811, %v530, %v1023
        %v1025 = vsel %vm813, %v531, %v1024
        %v1026 = vsel %vm815, %v532, %v1025
        %v1027 = vsel %vm817, %v533, %v1026
        %v1028 = vsel %vm819, %v534, %v1027
        %v1037 = vsel %vm807, %v784, %v783
        %v1038 = vsel %vm809, %v785, %v1037
        %v1039 = vsel %vm811, %v786, %v1038
        %v1040 = vsel %vm813, %v787, %v1039
        %v1041 = vsel %vm815, %v788, %v1040
        %v1042 = vsel %vm817, %v789, %v1041
        %v1043 = vsel %vm819, %v790, %v1042
        %v1044 = vsel %vm286, %v1028, 0
        %v1046 = vsel %vm286, %v1043, 0
        %1048 = vmatprep.subr.mxu0 0.0
        %1049 = vmatpush1.xpose.msra.mxu0 %v1046
        %1050 = vmatprep.subr.mxu0 0.0
        %1051 = vmatpush1.xpose.msra.mxu0 0.0
        %1052 = vmatprep.subr.mxu0 0.0
        %1053 = vmatpush1.xpose.msra.mxu0 0.0
        %1054 = vmatprep.subr.mxu0 0.0
        %1055 = vmatpush1.xpose.msra.mxu0 0.0
        %1056 = vmatprep.subr.mxu0 0.0
        %1057 = vmatpush1.xpose.msra.mxu0 0.0
        %1058 = vmatprep.subr.mxu0 0.0
        %1059 = vmatpush1.xpose.msra.mxu0 0.0
        %1060 = vmatprep.subr.mxu0 0.0
        %1061 = vmatpush1.xpose.msra.mxu0 0.0
        %1062 = vmatprep.subr.mxu0 0.0
        %1063 = vmatpush1.xpose.msra.mxu0 0.0
        %1064 = vmatprep.subr.mxu0 0.0
        %1065 = vmatpush1.xpose.msra.mxu0 0.0
        %1066 = vmatprep.subr.mxu0 0.0
        %1067 = vmatpush1.xpose.msra.mxu0 0.0
        %1068 = vmatprep.subr.mxu0 0.0
        %1069 = vmatpush1.xpose.msra.mxu0 0.0
        %1070 = vmatprep.subr.mxu0 0.0
        %1071 = vmatpush1.xpose.msra.mxu0 0.0
        %1072 = vmatprep.subr.mxu0 0.0
        %1073 = vmatpush1.xpose.msra.mxu0 0.0
        %1074 = vmatprep.subr.mxu0 0.0
        %1075 = vmatpush1.xpose.msra.mxu0 0.0
        %1076 = vmatprep.subr.mxu0 0.0
        %1077 = vmatpush1.xpose.msra.mxu0 0.0
        %1078 = vmatprep.subr.mxu0 0.0
        %1079 = vmatpush1.xpose.msra.mxu0 0.0
        %1080 = vmatprep.subr.mxu0 0.0
        %1081 = vmatpush1.xpose.msra.mxu0 0.0
        %1082 = vmatprep.subr.mxu0 0.0
        %1083 = vmatpush1.xpose.msra.mxu0 0.0
        %1084 = vmatprep.subr.mxu0 0.0
        %1085 = vmatpush1.xpose.msra.mxu0 0.0
        %1086 = vmatprep.subr.mxu0 0.0
        %1087 = vmatpush1.xpose.msra.mxu0 0.0
        %1088 = vmatprep.subr.mxu0 0.0
        %1089 = vmatpush1.xpose.msra.mxu0 0.0
        %1090 = vmatprep.subr.mxu0 0.0
        %1091 = vmatpush1.xpose.msra.mxu0 0.0
        %1092 = vmatprep.subr.mxu0 0.0
        %1093 = vmatpush1.xpose.msra.mxu0 0.0
        %1094 = vmatprep.subr.mxu0 0.0
        %1095 = vmatpush1.xpose.msra.mxu0 0.0
        %1096 = vmatprep.subr.mxu0 0.0
        %1097 = vmatpush1.xpose.msra.mxu0 0.0
        %1098 = vmatprep.subr.mxu0 0.0
        %1099 = vmatpush1.xpose.msra.mxu0 0.0
        %1100 = vmatprep.subr.mxu0 0.0
        %1101 = vmatpush1.xpose.msra.mxu0 0.0
        %1102 = vmatprep.subr.mxu0 0.0
        %1103 = vmatpush1.xpose.msra.mxu0 0.0
        %1104 = vmatprep.subr.mxu0 0.0
        %1105 = vmatpush1.xpose.msra.mxu0 0.0
        %1106 = vmatprep.subr.mxu0 0.0
        %1107 = vmatpush1.xpose.msra.mxu0 0.0
        %1108 = vmatprep.subr.mxu0 0.0
        %1109 = vmatpush1.xpose.msra.mxu0 0.0
        %1110 = vmatprep.subr.mxu0 0.0
        %1111 = vmatpush1.xpose.msra.mxu0 0.0
        %1112 = vmatprep.mubr.f32.mxu0 0.0
        %1113 = vmatmul.mubr.f32.gmra.mrb[0].mxu0 %v1044
        %v1114 = vpop.f32.mrb[0].mxu0
        %v1115 = vadd.f32 0.0, %v1114
        %v1116 = vpop.f32.mrb[0].mxu0
        %1117 = vdwg.mxu0
        %v1126 = vsel %vm807, %v536, %v535
        %v1127 = vsel %vm809, %v537, %v1126
        %v1128 = vsel %vm811, %v538, %v1127
        %v1129 = vsel %vm813, %v539, %v1128
        %v1130 = vsel %vm815, %v540, %v1129
        %v1131 = vsel %vm817, %v541, %v1130
        %v1132 = vsel %vm819, %v542, %v1131
        %v1141 = vsel %vm807, %v792, %v791
        %v1142 = vsel %vm809, %v793, %v1141
        %v1143 = vsel %vm811, %v794, %v1142
        %v1144 = vsel %vm813, %v795, %v1143
        %v1145 = vsel %vm815, %v796, %v1144
        %v1146 = vsel %vm817, %v797, %v1145
        %v1147 = vsel %vm819, %v798, %v1146
        %v1148 = vsel %vm286, %v1132, 0
        %v1150 = vsel %vm286, %v1147, 0
        %1152 = vmatprep.subr.mxu0 0.0
        %1153 = vmatpush1.xpose.msra.mxu0 %v1150
        %1154 = vmatprep.subr.mxu0 0.0
        %1155 = vmatpush1.xpose.msra.mxu0 0.0
        %1156 = vmatprep.subr.mxu0 0.0
        %1157 = vmatpush1.xpose.msra.mxu0 0.0
        %1158 = vmatprep.subr.mxu0 0.0
        %1159 = vmatpush1.xpose.msra.mxu0 0.0
        %1160 = vmatprep.subr.mxu0 0.0
        %1161 = vmatpush1.xpose.msra.mxu0 0.0
        %1162 = vmatprep.subr.mxu0 0.0
        %1163 = vmatpush1.xpose.msra.mxu0 0.0
        %1164 = vmatprep.subr.mxu0 0.0
        %1165 = vmatpush1.xpose.msra.mxu0 0.0
        %1166 = vmatprep.subr.mxu0 0.0
        %1167 = vmatpush1.xpose.msra.mxu0 0.0
        %1168 = vmatprep.subr.mxu0 0.0
        %1169 = vmatpush1.xpose.msra.mxu0 0.0
        %1170 = vmatprep.subr.mxu0 0.0
        %1171 = vmatpush1.xpose.msra.mxu0 0.0
        %1172 = vmatprep.subr.mxu0 0.0
        %1173 = vmatpush1.xpose.msra.mxu0 0.0
        %1174 = vmatprep.subr.mxu0 0.0
        %1175 = vmatpush1.xpose.msra.mxu0 0.0
        %1176 = vmatprep.subr.mxu0 0.0
        %1177 = vmatpush1.xpose.msra.mxu0 0.0
        %1178 = vmatprep.subr.mxu0 0.0
        %1179 = vmatpush1.xpose.msra.mxu0 0.0
        %1180 = vmatprep.subr.mxu0 0.0
        %1181 = vmatpush1.xpose.msra.mxu0 0.0
        %1182 = vmatprep.subr.mxu0 0.0
        %1183 = vmatpush1.xpose.msra.mxu0 0.0
        %1184 = vmatprep.subr.mxu0 0.0
        %1185 = vmatpush1.xpose.msra.mxu0 0.0
        %1186 = vmatprep.subr.mxu0 0.0
        %1187 = vmatpush1.xpose.msra.mxu0 0.0
        %1188 = vmatprep.subr.mxu0 0.0
        %1189 = vmatpush1.xpose.msra.mxu0 0.0
        %1190 = vmatprep.subr.mxu0 0.0
        %1191 = vmatpush1.xpose.msra.mxu0 0.0
        %1192 = vmatprep.subr.mxu0 0.0
        %1193 = vmatpush1.xpose.msra.mxu0 0.0
        %1194 = vmatprep.subr.mxu0 0.0
        %1195 = vmatpush1.xpose.msra.mxu0 0.0
        %1196 = vmatprep.subr.mxu0 0.0
        %1197 = vmatpush1.xpose.msra.mxu0 0.0
        %1198 = vmatprep.subr.mxu0 0.0
        %1199 = vmatpush1.xpose.msra.mxu0 0.0
        %1200 = vmatprep.subr.mxu0 0.0
        %1201 = vmatpush1.xpose.msra.mxu0 0.0
        %1202 = vmatprep.subr.mxu0 0.0
        %1203 = vmatpush1.xpose.msra.mxu0 0.0
        %1204 = vmatprep.subr.mxu0 0.0
        %1205 = vmatpush1.xpose.msra.mxu0 0.0
        %1206 = vmatprep.subr.mxu0 0.0
        %1207 = vmatpush1.xpose.msra.mxu0 0.0
        %1208 = vmatprep.subr.mxu0 0.0
        %1209 = vmatpush1.xpose.msra.mxu0 0.0
        %1210 = vmatprep.subr.mxu0 0.0
        %1211 = vmatpush1.xpose.msra.mxu0 0.0
        %1212 = vmatprep.subr.mxu0 0.0
        %1213 = vmatpush1.xpose.msra.mxu0 0.0
        %1214 = vmatprep.subr.mxu0 0.0
        %1215 = vmatpush1.xpose.msra.mxu0 0.0
        %1216 = vmatprep.mubr.f32.mxu0 0.0
        %1217 = vmatmul.mubr.f32.gmra.mrb[0].mxu0 %v1148
        %v1218 = vpop.f32.mrb[0].mxu0
        %v1219 = vadd.f32 0.0, %v1218
        %v1220 = vpop.f32.mrb[0].mxu0
        %1221 = vdwg.mxu0
        %v1222 = vmul.f32 %v907, 0.17677669
        %v1223 = vmul.f32 %v1011, 0.17677669
        %v1224 = vmul.f32 %v1115, 0.17677669
        %v1225 = vmul.f32 %v1219, 0.17677669
        %v1226 = vld [vmem:[%s219] sm:$0xff]
        %v1227 = vld [vmem:[%s219 + $0x8] sm:$0xff]
        %v1228 = vld [vmem:[%s219 + $0x10] sm:$0xff]
        %v1229 = vld [vmem:[%s219 + $0x18] sm:$0xff]
        %v1230 = vmax.f32 %v1222, 0.0
        %v1231 = vmax.f32 %v1223, 0.0
        %v1232 = vmax.f32 %v1224, 0.0
        %v1233 = vmax.f32 %v1225, 0.0
        %v1234 = vadd.f32 %v1230, 1e-06
        %v1235 = vadd.f32 %v1231, 1e-06
        %v1236 = vadd.f32 %v1232, 1e-06
        %v1237 = vadd.f32 %v1233, 1e-06
        %v1238 = vlog2.pop %v1234
        %v1239 = vmul.f32 %v1238, 0.6931472
        %v1240 = vlog2.pop %v1235
        %v1241 = vmul.f32 %v1240, 0.6931472
        %v1242 = vlog2.pop %v1236
        %v1243 = vmul.f32 %v1242, 0.6931472
        %v1244 = vlog2.pop %v1237
        %v1245 = vmul.f32 %v1244, 0.6931472
        %v1246 = vadd.f32 %v1226, 1e-06
        %v1247 = vadd.f32 %v1227, 1e-06
        %v1248 = vadd.f32 %v1228, 1e-06
        %v1249 = vadd.f32 %v1229, 1e-06
        %v1250 = vlog2.pop %v1246
        %v1251 = vmul.f32 %v1250, 0.6931472
        %v1252 = vlog2.pop %v1247
        %v1253 = vmul.f32 %v1252, 0.6931472
        %v1254 = vlog2.pop %v1248
        %v1255 = vmul.f32 %v1254, 0.6931472
        %v1256 = vlog2.pop %v1249
        %v1257 = vmul.f32 %v1256, 0.6931472
        %v1258 = vsub.f32 0.0, %v1251
        %v1259 = vsub.f32 0.0, %v1253
        %v1260 = vsub.f32 0.0, %v1255
        %v1261 = vsub.f32 0.0, %v1257
        %v1262 = vadd.f32 %v1258, 1e-06
        %v1263 = vadd.f32 %v1259, 1e-06
        %v1264 = vadd.f32 %v1260, 1e-06
        %v1265 = vadd.f32 %v1261, 1e-06
        %v1266 = vlog2.pop %v1262
        %v1267 = vmul.f32 %v1266, 0.6931472
        %v1268 = vlog2.pop %v1263
        %v1269 = vmul.f32 %v1268, 0.6931472
        %v1270 = vlog2.pop %v1264
        %v1271 = vmul.f32 %v1270, 0.6931472
        %v1272 = vlog2.pop %v1265
        %v1273 = vmul.f32 %v1272, 0.6931472
        %v1274 = vsub.f32 0.0, %v1267
        %v1275 = vsub.f32 0.0, %v1269
        %v1276 = vsub.f32 0.0, %v1271
        %v1277 = vsub.f32 0.0, %v1273
        %v1278 = vadd.f32 %v1239, %v1274
        %v1279 = vadd.f32 %v1241, %v1275
        %v1280 = vadd.f32 %v1243, %v1276
        %v1281 = vadd.f32 %v1245, %v1277
        %v1282 = vrcp.pop 0.75
        %v1283 = vmul.f32 %v1278, %v1282
        %v1284 = vmul.f32 %v1279, %v1282
        %v1285 = vmul.f32 %v1280, %v1282
        %v1286 = vmul.f32 %v1281, %v1282
        %vm1287 = vcmask 64512
        %v1288 = vsel %vm1287, %v1283, -inf
        %1289 = vmax.xlane.f32.xlu0 %v1288
        %v1290 = vpop.xlane.xlu0 %1289
        %v1291 = vsel %vm1287, %v1284, -inf
        %1292 = vmax.xlane.f32.xlu0 %v1291
        %v1293 = vpop.xlane.xlu0 %1292
        %v1294 = vsel %vm1287, %v1285, -inf
        %1295 = vmax.xlane.f32.xlu0 %v1294
        %v1296 = vpop.xlane.xlu0 %1295
        %v1297 = vsel %vm1287, %v1286, -inf
        %1298 = vmax.xlane.f32.xlu0 %v1297
        %v1299 = vpop.xlane.xlu0 %1298
        %v1300 = vsub.f32 %v1283, %v1290
        %v1301 = vsub.f32 %v1284, %v1293
        %v1302 = vsub.f32 %v1285, %v1296
        %v1303 = vsub.f32 %v1286, %v1299
        %v1304 = vmul.f32 %v1300, 1.442695
        %v1305 = vpow.pop %v1304
        %v1306 = vmul.f32 %v1301, 1.442695
        %v1307 = vpow.pop %v1306
        %v1308 = vmul.f32 %v1302, 1.442695
        %v1309 = vpow.pop %v1308
        %v1310 = vmul.f32 %v1303, 1.442695
        %v1311 = vpow.pop %v1310
        %v1312 = vsel %vm1287, %v1305, 0.0
        %1313 = vadd.xlane.f32.xlu0 %v1312
        %v1314 = vpop.xlane.xlu0 %1313
        %v1315 = vsel %vm1287, %v1307, 0.0
        %1316 = vadd.xlane.f32.xlu0 %v1315
        %v1317 = vpop.xlane.xlu0 %1316
        %v1318 = vsel %vm1287, %v1309, 0.0
        %1319 = vadd.xlane.f32.xlu0 %v1318
        %v1320 = vpop.xlane.xlu0 %1319
        %v1321 = vsel %vm1287, %v1311, 0.0
        %1322 = vadd.xlane.f32.xlu0 %v1321
        %v1323 = vpop.xlane.xlu0 %1322
        %v1324 = vlog2.pop %v1314
        %v1325 = vmul.f32 %v1324, 0.6931472
        %v1326 = vlog2.pop %v1317
        %v1327 = vmul.f32 %v1326, 0.6931472
        %v1328 = vlog2.pop %v1320
        %v1329 = vmul.f32 %v1328, 0.6931472
        %v1330 = vlog2.pop %v1323
        %v1331 = vmul.f32 %v1330, 0.6931472
        %v1332 = vadd.f32 %v1290, %v1325
        %v1333 = vadd.f32 %v1293, %v1327
        %v1334 = vadd.f32 %v1296, %v1329
        %v1335 = vadd.f32 %v1299, %v1331
        %v1336 = vsub.f32 %v1283, %v1332
        %v1337 = vsub.f32 %v1284, %v1333
        %v1338 = vsub.f32 %v1285, %v1334
        %v1339 = vsub.f32 %v1286, %v1335
        %v1340 = vsel %vm1287, %v1336, -inf
        %v1341 = vrot.slane %v1340, 4
        %v1342 = vmax.f32 %v1340, %v1341
        %v1343 = vrot.slane %v1342, 2
        %v1344 = vmax.f32 %v1342, %v1343
        %v1345 = vrot.slane %v1344, 1
        %v1346 = vmax.f32 %v1344, %v1345
        %v1347 = vsel %vm1287, %v1337, -inf
        %v1348 = vrot.slane %v1347, 4
        %v1349 = vmax.f32 %v1347, %v1348
        %v1350 = vrot.slane %v1349, 2
        %v1351 = vmax.f32 %v1349, %v1350
        %v1352 = vrot.slane %v1351, 1
        %v1353 = vmax.f32 %v1351, %v1352
        %v1354 = vsel %vm1287, %v1338, -inf
        %v1355 = vrot.slane %v1354, 4
        %v1356 = vmax.f32 %v1354, %v1355
        %v1357 = vrot.slane %v1356, 2
        %v1358 = vmax.f32 %v1356, %v1357
        %v1359 = vrot.slane %v1358, 1
        %v1360 = vmax.f32 %v1358, %v1359
        %v1361 = vsel %vm1287, %v1339, -inf
        %v1362 = vrot.slane %v1361, 4
        %v1363 = vmax.f32 %v1361, %v1362
        %v1364 = vrot.slane %v1363, 2
        %v1365 = vmax.f32 %v1363, %v1364
        %v1366 = vrot.slane %v1365, 1
        %v1367 = vmax.f32 %v1365, %v1366
        %v1368 = vsub.f32 %v1336, %v1346
        %v1369 = vsub.f32 %v1337, %v1353
        %v1370 = vsub.f32 %v1338, %v1360
        %v1371 = vsub.f32 %v1339, %v1367
        %v1372 = vmul.f32 %v1368, 1.442695
        %v1373 = vpow.pop %v1372
        %v1374 = vmul.f32 %v1369, 1.442695
        %v1375 = vpow.pop %v1374
        %v1376 = vmul.f32 %v1370, 1.442695
        %v1377 = vpow.pop %v1376
        %v1378 = vmul.f32 %v1371, 1.442695
        %v1379 = vpow.pop %v1378
        %v1380 = vsel %vm1287, %v1373, 0.0
        %v1381 = vrot.slane %v1380, 4
        %v1382 = vadd.f32 %v1380, %v1381
        %v1383 = vrot.slane %v1382, 2
        %v1384 = vadd.f32 %v1382, %v1383
        %v1385 = vrot.slane %v1384, 1
        %v1386 = vadd.f32 %v1384, %v1385
        %v1387 = vsel %vm1287, %v1375, 0.0
        %v1388 = vrot.slane %v1387, 4
        %v1389 = vadd.f32 %v1387, %v1388
        %v1390 = vrot.slane %v1389, 2
        %v1391 = vadd.f32 %v1389, %v1390
        %v1392 = vrot.slane %v1391, 1
        %v1393 = vadd.f32 %v1391, %v1392
        %v1394 = vsel %vm1287, %v1377, 0.0
        %v1395 = vrot.slane %v1394, 4
        %v1396 = vadd.f32 %v1394, %v1395
        %v1397 = vrot.slane %v1396, 2
        %v1398 = vadd.f32 %v1396, %v1397
        %v1399 = vrot.slane %v1398, 1
        %v1400 = vadd.f32 %v1398, %v1399
        %v1401 = vsel %vm1287, %v1379, 0.0
        %v1402 = vrot.slane %v1401, 4
        %v1403 = vadd.f32 %v1401, %v1402
        %v1404 = vrot.slane %v1403, 2
        %v1405 = vadd.f32 %v1403, %v1404
        %v1406 = vrot.slane %v1405, 1
        %v1407 = vadd.f32 %v1405, %v1406
        %v1408 = vlog2.pop %v1386
        %v1409 = vmul.f32 %v1408, 0.6931472
        %v1410 = vlog2.pop %v1393
        %v1411 = vmul.f32 %v1410, 0.6931472
        %v1412 = vlog2.pop %v1400
        %v1413 = vmul.f32 %v1412, 0.6931472
        %v1414 = vlog2.pop %v1407
        %v1415 = vmul.f32 %v1414, 0.6931472
        %v1416 = vadd.f32 %v1346, %v1409
        %v1417 = vadd.f32 %v1353, %v1411
        %v1418 = vadd.f32 %v1360, %v1413
        %v1419 = vadd.f32 %v1367, %v1415
        %v1420 = vsub.f32 %v1336, %v1416
        %v1421 = vsub.f32 %v1337, %v1417
        %v1422 = vsub.f32 %v1338, %v1418
        %v1423 = vsub.f32 %v1339, %v1419
        %v1424 = vsel %vm1287, %v1420, -inf
        %1425 = vmax.xlane.f32.xlu0 %v1424
        %v1426 = vpop.xlane.xlu0 %1425
        %v1427 = vsel %vm1287, %v1421, -inf
        %1428 = vmax.xlane.f32.xlu0 %v1427
        %v1429 = vpop.xlane.xlu0 %1428
        %v1430 = vsel %vm1287, %v1422, -inf
        %1431 = vmax.xlane.f32.xlu0 %v1430
        %v1432 = vpop.xlane.xlu0 %1431
        %v1433 = vsel %vm1287, %v1423, -inf
        %1434 = vmax.xlane.f32.xlu0 %v1433
        %v1435 = vpop.xlane.xlu0 %1434
        %v1436 = vsub.f32 %v1420, %v1426
        %v1437 = vsub.f32 %v1421, %v1429
        %v1438 = vsub.f32 %v1422, %v1432
        %v1439 = vsub.f32 %v1423, %v1435
        %v1440 = vmul.f32 %v1436, 1.442695
        %v1441 = vpow.pop %v1440
        %v1442 = vmul.f32 %v1437, 1.442695
        %v1443 = vpow.pop %v1442
        %v1444 = vmul.f32 %v1438, 1.442695
        %v1445 = vpow.pop %v1444
        %v1446 = vmul.f32 %v1439, 1.442695
        %v1447 = vpow.pop %v1446
        %v1448 = vsel %vm1287, %v1441, 0.0
        %1449 = vadd.xlane.f32.xlu0 %v1448
        %v1450 = vpop.xlane.xlu0 %1449
        %v1451 = vsel %vm1287, %v1443, 0.0
        %1452 = vadd.xlane.f32.xlu0 %v1451
        %v1453 = vpop.xlane.xlu0 %1452
        %v1454 = vsel %vm1287, %v1445, 0.0
        %1455 = vadd.xlane.f32.xlu0 %v1454
        %v1456 = vpop.xlane.xlu0 %1455
        %v1457 = vsel %vm1287, %v1447, 0.0
        %1458 = vadd.xlane.f32.xlu0 %v1457
        %v1459 = vpop.xlane.xlu0 %1458
        %v1460 = vlog2.pop %v1450
        %v1461 = vmul.f32 %v1460, 0.6931472
        %v1462 = vlog2.pop %v1453
        %v1463 = vmul.f32 %v1462, 0.6931472
        %v1464 = vlog2.pop %v1456
        %v1465 = vmul.f32 %v1464, 0.6931472
        %v1466 = vlog2.pop %v1459
        %v1467 = vmul.f32 %v1466, 0.6931472
        %v1468 = vadd.f32 %v1426, %v1461
        %v1469 = vadd.f32 %v1429, %v1463
        %v1470 = vadd.f32 %v1432, %v1465
        %v1471 = vadd.f32 %v1435, %v1467
        %v1472 = vsub.f32 %v1420, %v1468
        %v1473 = vsub.f32 %v1421, %v1469
        %v1474 = vsub.f32 %v1422, %v1470
        %v1475 = vsub.f32 %v1423, %v1471
        %v1476 = vsel %vm1287, %v1472, -inf
        %v1477 = vrot.slane %v1476, 4
        %v1478 = vmax.f32 %v1476, %v1477
        %v1479 = vrot.slane %v1478, 2
        %v1480 = vmax.f32 %v1478, %v1479
        %v1481 = vrot.slane %v1480, 1
        %v1482 = vmax.f32 %v1480, %v1481
        %v1483 = vsel %vm1287, %v1473, -inf
        %v1484 = vrot.slane %v1483, 4
        %v1485 = vmax.f32 %v1483, %v1484
        %v1486 = vrot.slane %v1485, 2
        %v1487 = vmax.f32 %v1485, %v1486
        %v1488 = vrot.slane %v1487, 1
        %v1489 = vmax.f32 %v1487, %v1488
        %v1490 = vsel %vm1287, %v1474, -inf
        %v1491 = vrot.slane %v1490, 4
        %v1492 = vmax.f32 %v1490, %v1491
        %v1493 = vrot.slane %v1492, 2
        %v1494 = vmax.f32 %v1492, %v1493
        %v1495 = vrot.slane %v1494, 1
        %v1496 = vmax.f32 %v1494, %v1495
        %v1497 = vsel %vm1287, %v1475, -inf
        %v1498 = vrot.slane %v1497, 4
        %v1499 = vmax.f32 %v1497, %v1498
        %v1500 = vrot.slane %v1499, 2
        %v1501 = vmax.f32 %v1499, %v1500
        %v1502 = vrot.slane %v1501, 1
        %v1503 = vmax.f32 %v1501, %v1502
        %v1504 = vsub.f32 %v1472, %v1482
        %v1505 = vsub.f32 %v1473, %v1489
        %v1506 = vsub.f32 %v1474, %v1496
        %v1507 = vsub.f32 %v1475, %v1503
        %v1508 = vmul.f32 %v1504, 1.442695
        %v1509 = vpow.pop %v1508
        %v1510 = vmul.f32 %v1505, 1.442695
        %v1511 = vpow.pop %v1510
        %v1512 = vmul.f32 %v1506, 1.442695
        %v1513 = vpow.pop %v1512
        %v1514 = vmul.f32 %v1507, 1.442695
        %v1515 = vpow.pop %v1514
        %v1516 = vsel %vm1287, %v1509, 0.0
        %v1517 = vrot.slane %v1516, 4
        %v1518 = vadd.f32 %v1516, %v1517
        %v1519 = vrot.slane %v1518, 2
        %v1520 = vadd.f32 %v1518, %v1519
        %v1521 = vrot.slane %v1520, 1
        %v1522 = vadd.f32 %v1520, %v1521
        %v1523 = vsel %vm1287, %v1511, 0.0
        %v1524 = vrot.slane %v1523, 4
        %v1525 = vadd.f32 %v1523, %v1524
        %v1526 = vrot.slane %v1525, 2
        %v1527 = vadd.f32 %v1525, %v1526
        %v1528 = vrot.slane %v1527, 1
        %v1529 = vadd.f32 %v1527, %v1528
        %v1530 = vsel %vm1287, %v1513, 0.0
        %v1531 = vrot.slane %v1530, 4
        %v1532 = vadd.f32 %v1530, %v1531
        %v1533 = vrot.slane %v1532, 2
        %v1534 = vadd.f32 %v1532, %v1533
        %v1535 = vrot.slane %v1534, 1
        %v1536 = vadd.f32 %v1534, %v1535
        %v1537 = vsel %vm1287, %v1515, 0.0
        %v1538 = vrot.slane %v1537, 4
        %v1539 = vadd.f32 %v1537, %v1538
        %v1540 = vrot.slane %v1539, 2
        %v1541 = vadd.f32 %v1539, %v1540
        %v1542 = vrot.slane %v1541, 1
        %v1543 = vadd.f32 %v1541, %v1542
        %v1544 = vlog2.pop %v1522
        %v1545 = vmul.f32 %v1544, 0.6931472
        %v1546 = vlog2.pop %v1529
        %v1547 = vmul.f32 %v1546, 0.6931472
        %v1548 = vlog2.pop %v1536
        %v1549 = vmul.f32 %v1548, 0.6931472
        %v1550 = vlog2.pop %v1543
        %v1551 = vmul.f32 %v1550, 0.6931472
        %v1552 = vadd.f32 %v1482, %v1545
        %v1553 = vadd.f32 %v1489, %v1547
        %v1554 = vadd.f32 %v1496, %v1549
        %v1555 = vadd.f32 %v1503, %v1551
        %v1556 = vsub.f32 %v1472, %v1552
        %v1557 = vsub.f32 %v1473, %v1553
        %v1558 = vsub.f32 %v1474, %v1554
        %v1559 = vsub.f32 %v1475, %v1555
        %v1560 = vsel %vm1287, %v1556, -inf
        %1561 = vmax.xlane.f32.xlu0 %v1560
        %v1562 = vpop.xlane.xlu0 %1561
        %v1563 = vsel %vm1287, %v1557, -inf
        %1564 = vmax.xlane.f32.xlu0 %v1563
        %v1565 = vpop.xlane.xlu0 %1564
        %v1566 = vsel %vm1287, %v1558, -inf
        %1567 = vmax.xlane.f32.xlu0 %v1566
        %v1568 = vpop.xlane.xlu0 %1567
        %v1569 = vsel %vm1287, %v1559, -inf
        %1570 = vmax.xlane.f32.xlu0 %v1569
        %v1571 = vpop.xlane.xlu0 %1570
        %v1572 = vsub.f32 %v1556, %v1562
        %v1573 = vsub.f32 %v1557, %v1565
        %v1574 = vsub.f32 %v1558, %v1568
        %v1575 = vsub.f32 %v1559, %v1571
        %v1576 = vmul.f32 %v1572, 1.442695
        %v1577 = vpow.pop %v1576
        %v1578 = vmul.f32 %v1573, 1.442695
        %v1579 = vpow.pop %v1578
        %v1580 = vmul.f32 %v1574, 1.442695
        %v1581 = vpow.pop %v1580
        %v1582 = vmul.f32 %v1575, 1.442695
        %v1583 = vpow.pop %v1582
        %v1584 = vsel %vm1287, %v1577, 0.0
        %1585 = vadd.xlane.f32.xlu0 %v1584
        %v1586 = vpop.xlane.xlu0 %1585
        %v1587 = vsel %vm1287, %v1579, 0.0
        %1588 = vadd.xlane.f32.xlu0 %v1587
        %v1589 = vpop.xlane.xlu0 %1588
        %v1590 = vsel %vm1287, %v1581, 0.0
        %1591 = vadd.xlane.f32.xlu0 %v1590
        %v1592 = vpop.xlane.xlu0 %1591
        %v1593 = vsel %vm1287, %v1583, 0.0
        %1594 = vadd.xlane.f32.xlu0 %v1593
        %v1595 = vpop.xlane.xlu0 %1594
        %v1596 = vlog2.pop %v1586
        %v1597 = vmul.f32 %v1596, 0.6931472
        %v1598 = vlog2.pop %v1589
        %v1599 = vmul.f32 %v1598, 0.6931472
        %v1600 = vlog2.pop %v1592
        %v1601 = vmul.f32 %v1600, 0.6931472
        %v1602 = vlog2.pop %v1595
        %v1603 = vmul.f32 %v1602, 0.6931472
        %v1604 = vadd.f32 %v1562, %v1597
        %v1605 = vadd.f32 %v1565, %v1599
        %v1606 = vadd.f32 %v1568, %v1601
        %v1607 = vadd.f32 %v1571, %v1603
        %v1608 = vsub.f32 %v1556, %v1604
        %v1609 = vsub.f32 %v1557, %v1605
        %v1610 = vsub.f32 %v1558, %v1606
        %v1611 = vsub.f32 %v1559, %v1607
        %v1612 = vsel %vm1287, %v1608, -inf
        %v1613 = vrot.slane %v1612, 4
        %v1614 = vmax.f32 %v1612, %v1613
        %v1615 = vrot.slane %v1614, 2
        %v1616 = vmax.f32 %v1614, %v1615
        %v1617 = vrot.slane %v1616, 1
        %v1618 = vmax.f32 %v1616, %v1617
        %v1619 = vsel %vm1287, %v1609, -inf
        %v1620 = vrot.slane %v1619, 4
        %v1621 = vmax.f32 %v1619, %v1620
        %v1622 = vrot.slane %v1621, 2
        %v1623 = vmax.f32 %v1621, %v1622
        %v1624 = vrot.slane %v1623, 1
        %v1625 = vmax.f32 %v1623, %v1624
        %v1626 = vsel %vm1287, %v1610, -inf
        %v1627 = vrot.slane %v1626, 4
        %v1628 = vmax.f32 %v1626, %v1627
        %v1629 = vrot.slane %v1628, 2
        %v1630 = vmax.f32 %v1628, %v1629
        %v1631 = vrot.slane %v1630, 1
        %v1632 = vmax.f32 %v1630, %v1631
        %v1633 = vsel %vm1287, %v1611, -inf
        %v1634 = vrot.slane %v1633, 4
        %v1635 = vmax.f32 %v1633, %v1634
        %v1636 = vrot.slane %v1635, 2
        %v1637 = vmax.f32 %v1635, %v1636
        %v1638 = vrot.slane %v1637, 1
        %v1639 = vmax.f32 %v1637, %v1638
        %v1640 = vsub.f32 %v1608, %v1618
        %v1641 = vsub.f32 %v1609, %v1625
        %v1642 = vsub.f32 %v1610, %v1632
        %v1643 = vsub.f32 %v1611, %v1639
        %v1644 = vmul.f32 %v1640, 1.442695
        %v1645 = vpow.pop %v1644
        %v1646 = vmul.f32 %v1641, 1.442695
        %v1647 = vpow.pop %v1646
        %v1648 = vmul.f32 %v1642, 1.442695
        %v1649 = vpow.pop %v1648
        %v1650 = vmul.f32 %v1643, 1.442695
        %v1651 = vpow.pop %v1650
        %v1652 = vsel %vm1287, %v1645, 0.0
        %v1653 = vrot.slane %v1652, 4
        %v1654 = vadd.f32 %v1652, %v1653
        %v1655 = vrot.slane %v1654, 2
        %v1656 = vadd.f32 %v1654, %v1655
        %v1657 = vrot.slane %v1656, 1
        %v1658 = vadd.f32 %v1656, %v1657
        %v1659 = vsel %vm1287, %v1647, 0.0
        %v1660 = vrot.slane %v1659, 4
        %v1661 = vadd.f32 %v1659, %v1660
        %v1662 = vrot.slane %v1661, 2
        %v1663 = vadd.f32 %v1661, %v1662
        %v1664 = vrot.slane %v1663, 1
        %v1665 = vadd.f32 %v1663, %v1664
        %v1666 = vsel %vm1287, %v1649, 0.0
        %v1667 = vrot.slane %v1666, 4
        %v1668 = vadd.f32 %v1666, %v1667
        %v1669 = vrot.slane %v1668, 2
        %v1670 = vadd.f32 %v1668, %v1669
        %v1671 = vrot.slane %v1670, 1
        %v1672 = vadd.f32 %v1670, %v1671
        %v1673 = vsel %vm1287, %v1651, 0.0
        %v1674 = vrot.slane %v1673, 4
        %v1675 = vadd.f32 %v1673, %v1674
        %v1676 = vrot.slane %v1675, 2
        %v1677 = vadd.f32 %v1675, %v1676
        %v1678 = vrot.slane %v1677, 1
        %v1679 = vadd.f32 %v1677, %v1678
        %v1680 = vlog2.pop %v1658
        %v1681 = vmul.f32 %v1680, 0.6931472
        %v1682 = vlog2.pop %v1665
        %v1683 = vmul.f32 %v1682, 0.6931472
        %v1684 = vlog2.pop %v1672
        %v1685 = vmul.f32 %v1684, 0.6931472
        %v1686 = vlog2.pop %v1679
        %v1687 = vmul.f32 %v1686, 0.6931472
        %v1688 = vadd.f32 %v1618, %v1681
        %v1689 = vadd.f32 %v1625, %v1683
        %v1690 = vadd.f32 %v1632, %v1685
        %v1691 = vadd.f32 %v1639, %v1687
        %v1692 = vsub.f32 %v1608, %v1688
        %v1693 = vsub.f32 %v1609, %v1689
        %v1694 = vsub.f32 %v1610, %v1690
        %v1695 = vsub.f32 %v1611, %v1691
        %v1696 = vsel %vm1287, %v1692, -inf
        %1697 = vmax.xlane.f32.xlu0 %v1696
        %v1698 = vpop.xlane.xlu0 %1697
        %v1699 = vsel %vm1287, %v1693, -inf
        %1700 = vmax.xlane.f32.xlu0 %v1699
        %v1701 = vpop.xlane.xlu0 %1700
        %v1702 = vsel %vm1287, %v1694, -inf
        %1703 = vmax.xlane.f32.xlu0 %v1702
        %v1704 = vpop.xlane.xlu0 %1703
        %v1705 = vsel %vm1287, %v1695, -inf
        %1706 = vmax.xlane.f32.xlu0 %v1705
        %v1707 = vpop.xlane.xlu0 %1706
        %v1708 = vsub.f32 %v1692, %v1698
        %v1709 = vsub.f32 %v1693, %v1701
        %v1710 = vsub.f32 %v1694, %v1704
        %v1711 = vsub.f32 %v1695, %v1707
        %v1712 = vmul.f32 %v1708, 1.442695
        %v1713 = vpow.pop %v1712
        %v1714 = vmul.f32 %v1709, 1.442695
        %v1715 = vpow.pop %v1714
        %v1716 = vmul.f32 %v1710, 1.442695
        %v1717 = vpow.pop %v1716
        %v1718 = vmul.f32 %v1711, 1.442695
        %v1719 = vpow.pop %v1718
        %v1720 = vsel %vm1287, %v1713, 0.0
        %1721 = vadd.xlane.f32.xlu0 %v1720
        %v1722 = vpop.xlane.xlu0 %1721
        %v1723 = vsel %vm1287, %v1715, 0.0
        %1724 = vadd.xlane.f32.xlu0 %v1723
        %v1725 = vpop.xlane.xlu0 %1724
        %v1726 = vsel %vm1287, %v1717, 0.0
        %1727 = vadd.xlane.f32.xlu0 %v1726
        %v1728 = vpop.xlane.xlu0 %1727
        %v1729 = vsel %vm1287, %v1719, 0.0
        %1730 = vadd.xlane.f32.xlu0 %v1729
        %v1731 = vpop.xlane.xlu0 %1730
        %v1732 = vlog2.pop %v1722
        %v1733 = vmul.f32 %v1732, 0.6931472
        %v1734 = vlog2.pop %v1725
        %v1735 = vmul.f32 %v1734, 0.6931472
        %v1736 = vlog2.pop %v1728
        %v1737 = vmul.f32 %v1736, 0.6931472
        %v1738 = vlog2.pop %v1731
        %v1739 = vmul.f32 %v1738, 0.6931472
        %v1740 = vadd.f32 %v1698, %v1733
        %v1741 = vadd.f32 %v1701, %v1735
        %v1742 = vadd.f32 %v1704, %v1737
        %v1743 = vadd.f32 %v1707, %v1739
        %v1744 = vsub.f32 %v1692, %v1740
        %v1745 = vsub.f32 %v1693, %v1741
        %v1746 = vsub.f32 %v1694, %v1742
        %v1747 = vsub.f32 %v1695, %v1743
        %v1748 = vsel %vm1287, %v1744, -inf
        %v1749 = vrot.slane %v1748, 4
        %v1750 = vmax.f32 %v1748, %v1749
        %v1751 = vrot.slane %v1750, 2
        %v1752 = vmax.f32 %v1750, %v1751
        %v1753 = vrot.slane %v1752, 1
        %v1754 = vmax.f32 %v1752, %v1753
        %v1755 = vsel %vm1287, %v1745, -inf
        %v1756 = vrot.slane %v1755, 4
        %v1757 = vmax.f32 %v1755, %v1756
        %v1758 = vrot.slane %v1757, 2
        %v1759 = vmax.f32 %v1757, %v1758
        %v1760 = vrot.slane %v1759, 1
        %v1761 = vmax.f32 %v1759, %v1760
        %v1762 = vsel %vm1287, %v1746, -inf
        %v1763 = vrot.slane %v1762, 4
        %v1764 = vmax.f32 %v1762, %v1763
        %v1765 = vrot.slane %v1764, 2
        %v1766 = vmax.f32 %v1764, %v1765
        %v1767 = vrot.slane %v1766, 1
        %v1768 = vmax.f32 %v1766, %v1767
        %v1769 = vsel %vm1287, %v1747, -inf
        %v1770 = vrot.slane %v1769, 4
        %v1771 = vmax.f32 %v1769, %v1770
        %v1772 = vrot.slane %v1771, 2
        %v1773 = vmax.f32 %v1771, %v1772
        %v1774 = vrot.slane %v1773, 1
        %v1775 = vmax.f32 %v1773, %v1774
        %v1776 = vsub.f32 %v1744, %v1754
        %v1777 = vsub.f32 %v1745, %v1761
        %v1778 = vsub.f32 %v1746, %v1768
        %v1779 = vsub.f32 %v1747, %v1775
        %v1780 = vmul.f32 %v1776, 1.442695
        %v1781 = vpow.pop %v1780
        %v1782 = vmul.f32 %v1777, 1.442695
        %v1783 = vpow.pop %v1782
        %v1784 = vmul.f32 %v1778, 1.442695
        %v1785 = vpow.pop %v1784
        %v1786 = vmul.f32 %v1779, 1.442695
        %v1787 = vpow.pop %v1786
        %v1788 = vsel %vm1287, %v1781, 0.0
        %v1789 = vrot.slane %v1788, 4
        %v1790 = vadd.f32 %v1788, %v1789
        %v1791 = vrot.slane %v1790, 2
        %v1792 = vadd.f32 %v1790, %v1791
        %v1793 = vrot.slane %v1792, 1
        %v1794 = vadd.f32 %v1792, %v1793
        %v1795 = vsel %vm1287, %v1783, 0.0
        %v1796 = vrot.slane %v1795, 4
        %v1797 = vadd.f32 %v1795, %v1796
        %v1798 = vrot.slane %v1797, 2
        %v1799 = vadd.f32 %v1797, %v1798
        %v1800 = vrot.slane %v1799, 1
        %v1801 = vadd.f32 %v1799, %v1800
        %v1802 = vsel %vm1287, %v1785, 0.0
        %v1803 = vrot.slane %v1802, 4
        %v1804 = vadd.f32 %v1802, %v1803
        %v1805 = vrot.slane %v1804, 2
        %v1806 = vadd.f32 %v1804, %v1805
        %v1807 = vrot.slane %v1806, 1
        %v1808 = vadd.f32 %v1806, %v1807
        %v1809 = vsel %vm1287, %v1787, 0.0
        %v1810 = vrot.slane %v1809, 4
        %v1811 = vadd.f32 %v1809, %v1810
        %v1812 = vrot.slane %v1811, 2
        %v1813 = vadd.f32 %v1811, %v1812
        %v1814 = vrot.slane %v1813, 1
        %v1815 = vadd.f32 %v1813, %v1814
        %v1816 = vlog2.pop %v1794
        %v1817 = vmul.f32 %v1816, 0.6931472
        %v1818 = vlog2.pop %v1801
        %v1819 = vmul.f32 %v1818, 0.6931472
        %v1820 = vlog2.pop %v1808
        %v1821 = vmul.f32 %v1820, 0.6931472
        %v1822 = vlog2.pop %v1815
        %v1823 = vmul.f32 %v1822, 0.6931472
        %v1824 = vadd.f32 %v1754, %v1817
        %v1825 = vadd.f32 %v1761, %v1819
        %v1826 = vadd.f32 %v1768, %v1821
        %v1827 = vadd.f32 %v1775, %v1823
        %v1828 = vsub.f32 %v1744, %v1824
        %v1829 = vsub.f32 %v1745, %v1825
        %v1830 = vsub.f32 %v1746, %v1826
        %v1831 = vsub.f32 %v1747, %v1827
        %v1832 = vsel %vm1287, %v1828, -inf
        %1833 = vmax.xlane.f32.xlu0 %v1832
        %v1834 = vpop.xlane.xlu0 %1833
        %v1835 = vsel %vm1287, %v1829, -inf
        %1836 = vmax.xlane.f32.xlu0 %v1835
        %v1837 = vpop.xlane.xlu0 %1836
        %v1838 = vsel %vm1287, %v1830, -inf
        %1839 = vmax.xlane.f32.xlu0 %v1838
        %v1840 = vpop.xlane.xlu0 %1839
        %v1841 = vsel %vm1287, %v1831, -inf
        %1842 = vmax.xlane.f32.xlu0 %v1841
        %v1843 = vpop.xlane.xlu0 %1842
        %v1844 = vsub.f32 %v1828, %v1834
        %v1845 = vsub.f32 %v1829, %v1837
        %v1846 = vsub.f32 %v1830, %v1840
        %v1847 = vsub.f32 %v1831, %v1843
        %v1848 = vmul.f32 %v1844, 1.442695
        %v1849 = vpow.pop %v1848
        %v1850 = vmul.f32 %v1845, 1.442695
        %v1851 = vpow.pop %v1850
        %v1852 = vmul.f32 %v1846, 1.442695
        %v1853 = vpow.pop %v1852
        %v1854 = vmul.f32 %v1847, 1.442695
        %v1855 = vpow.pop %v1854
        %v1856 = vsel %vm1287, %v1849, 0.0
        %1857 = vadd.xlane.f32.xlu0 %v1856
        %v1858 = vpop.xlane.xlu0 %1857
        %v1859 = vsel %vm1287, %v1851, 0.0
        %1860 = vadd.xlane.f32.xlu0 %v1859
        %v1861 = vpop.xlane.xlu0 %1860
        %v1862 = vsel %vm1287, %v1853, 0.0
        %1863 = vadd.xlane.f32.xlu0 %v1862
        %v1864 = vpop.xlane.xlu0 %1863
        %v1865 = vsel %vm1287, %v1855, 0.0
        %1866 = vadd.xlane.f32.xlu0 %v1865
        %v1867 = vpop.xlane.xlu0 %1866
        %v1868 = vlog2.pop %v1858
        %v1869 = vmul.f32 %v1868, 0.6931472
        %v1870 = vlog2.pop %v1861
        %v1871 = vmul.f32 %v1870, 0.6931472
        %v1872 = vlog2.pop %v1864
        %v1873 = vmul.f32 %v1872, 0.6931472
        %v1874 = vlog2.pop %v1867
        %v1875 = vmul.f32 %v1874, 0.6931472
        %v1876 = vadd.f32 %v1834, %v1869
        %v1877 = vadd.f32 %v1837, %v1871
        %v1878 = vadd.f32 %v1840, %v1873
        %v1879 = vadd.f32 %v1843, %v1875
        %v1880 = vsub.f32 %v1828, %v1876
        %v1881 = vsub.f32 %v1829, %v1877
        %v1882 = vsub.f32 %v1830, %v1878
        %v1883 = vsub.f32 %v1831, %v1879
        %v1884 = vsel %vm1287, %v1880, -inf
        %v1885 = vrot.slane %v1884, 4
        %v1886 = vmax.f32 %v1884, %v1885
        %v1887 = vrot.slane %v1886, 2
        %v1888 = vmax.f32 %v1886, %v1887
        %v1889 = vrot.slane %v1888, 1
        %v1890 = vmax.f32 %v1888, %v1889
        %v1891 = vsel %vm1287, %v1881, -inf
        %v1892 = vrot.slane %v1891, 4
        %v1893 = vmax.f32 %v1891, %v1892
        %v1894 = vrot.slane %v1893, 2
        %v1895 = vmax.f32 %v1893, %v1894
        %v1896 = vrot.slane %v1895, 1
        %v1897 = vmax.f32 %v1895, %v1896
        %v1898 = vsel %vm1287, %v1882, -inf
        %v1899 = vrot.slane %v1898, 4
        %v1900 = vmax.f32 %v1898, %v1899
        %v1901 = vrot.slane %v1900, 2
        %v1902 = vmax.f32 %v1900, %v1901
        %v1903 = vrot.slane %v1902, 1
        %v1904 = vmax.f32 %v1902, %v1903
        %v1905 = vsel %vm1287, %v1883, -inf
        %v1906 = vrot.slane %v1905, 4
        %v1907 = vmax.f32 %v1905, %v1906
        %v1908 = vrot.slane %v1907, 2
        %v1909 = vmax.f32 %v1907, %v1908
        %v1910 = vrot.slane %v1909, 1
        %v1911 = vmax.f32 %v1909, %v1910
        %v1912 = vsub.f32 %v1880, %v1890
        %v1913 = vsub.f32 %v1881, %v1897
        %v1914 = vsub.f32 %v1882, %v1904
        %v1915 = vsub.f32 %v1883, %v1911
        %v1916 = vmul.f32 %v1912, 1.442695
        %v1917 = vpow.pop %v1916
        %v1918 = vmul.f32 %v1913, 1.442695
        %v1919 = vpow.pop %v1918
        %v1920 = vmul.f32 %v1914, 1.442695
        %v1921 = vpow.pop %v1920
        %v1922 = vmul.f32 %v1915, 1.442695
        %v1923 = vpow.pop %v1922
        %v1924 = vsel %vm1287, %v1917, 0.0
        %v1925 = vrot.slane %v1924, 4
        %v1926 = vadd.f32 %v1924, %v1925
        %v1927 = vrot.slane %v1926, 2
        %v1928 = vadd.f32 %v1926, %v1927
        %v1929 = vrot.slane %v1928, 1
        %v1930 = vadd.f32 %v1928, %v1929
        %v1931 = vsel %vm1287, %v1919, 0.0
        %v1932 = vrot.slane %v1931, 4
        %v1933 = vadd.f32 %v1931, %v1932
        %v1934 = vrot.slane %v1933, 2
        %v1935 = vadd.f32 %v1933, %v1934
        %v1936 = vrot.slane %v1935, 1
        %v1937 = vadd.f32 %v1935, %v1936
        %v1938 = vsel %vm1287, %v1921, 0.0
        %v1939 = vrot.slane %v1938, 4
        %v1940 = vadd.f32 %v1938, %v1939
        %v1941 = vrot.slane %v1940, 2
        %v1942 = vadd.f32 %v1940, %v1941
        %v1943 = vrot.slane %v1942, 1
        %v1944 = vadd.f32 %v1942, %v1943
        %v1945 = vsel %vm1287, %v1923, 0.0
        %v1946 = vrot.slane %v1945, 4
        %v1947 = vadd.f32 %v1945, %v1946
        %v1948 = vrot.slane %v1947, 2
        %v1949 = vadd.f32 %v1947, %v1948
        %v1950 = vrot.slane %v1949, 1
        %v1951 = vadd.f32 %v1949, %v1950
        %v1952 = vlog2.pop %v1930
        %v1953 = vmul.f32 %v1952, 0.6931472
        %v1954 = vlog2.pop %v1937
        %v1955 = vmul.f32 %v1954, 0.6931472
        %v1956 = vlog2.pop %v1944
        %v1957 = vmul.f32 %v1956, 0.6931472
        %v1958 = vlog2.pop %v1951
        %v1959 = vmul.f32 %v1958, 0.6931472
        %v1960 = vadd.f32 %v1890, %v1953
        %v1961 = vadd.f32 %v1897, %v1955
        %v1962 = vadd.f32 %v1904, %v1957
        %v1963 = vadd.f32 %v1911, %v1959
        %v1964 = vsub.f32 %v1880, %v1960
        %v1965 = vsub.f32 %v1881, %v1961
        %v1966 = vsub.f32 %v1882, %v1962
        %v1967 = vsub.f32 %v1883, %v1963
        %v1968 = vsel %vm1287, %v1964, -inf
        %1969 = vmax.xlane.f32.xlu0 %v1968
        %v1970 = vpop.xlane.xlu0 %1969
        %v1971 = vsel %vm1287, %v1965, -inf
        %1972 = vmax.xlane.f32.xlu0 %v1971
        %v1973 = vpop.xlane.xlu0 %1972
        %v1974 = vsel %vm1287, %v1966, -inf
        %1975 = vmax.xlane.f32.xlu0 %v1974
        %v1976 = vpop.xlane.xlu0 %1975
        %v1977 = vsel %vm1287, %v1967, -inf
        %1978 = vmax.xlane.f32.xlu0 %v1977
        %v1979 = vpop.xlane.xlu0 %1978
        %v1980 = vsub.f32 %v1964, %v1970
        %v1981 = vsub.f32 %v1965, %v1973
        %v1982 = vsub.f32 %v1966, %v1976
        %v1983 = vsub.f32 %v1967, %v1979
        %v1984 = vmul.f32 %v1980, 1.442695
        %v1985 = vpow.pop %v1984
        %v1986 = vmul.f32 %v1981, 1.442695
        %v1987 = vpow.pop %v1986
        %v1988 = vmul.f32 %v1982, 1.442695
        %v1989 = vpow.pop %v1988
        %v1990 = vmul.f32 %v1983, 1.442695
        %v1991 = vpow.pop %v1990
        %v1992 = vsel %vm1287, %v1985, 0.0
        %1993 = vadd.xlane.f32.xlu0 %v1992
        %v1994 = vpop.xlane.xlu0 %1993
        %v1995 = vsel %vm1287, %v1987, 0.0
        %1996 = vadd.xlane.f32.xlu0 %v1995
        %v1997 = vpop.xlane.xlu0 %1996
        %v1998 = vsel %vm1287, %v1989, 0.0
        %1999 = vadd.xlane.f32.xlu0 %v1998
        %v2000 = vpop.xlane.xlu0 %1999
        %v2001 = vsel %vm1287, %v1991, 0.0
        %2002 = vadd.xlane.f32.xlu0 %v2001
        %v2003 = vpop.xlane.xlu0 %2002
        %v2004 = vlog2.pop %v1994
        %v2005 = vmul.f32 %v2004, 0.6931472
        %v2006 = vlog2.pop %v1997
        %v2007 = vmul.f32 %v2006, 0.6931472
        %v2008 = vlog2.pop %v2000
        %v2009 = vmul.f32 %v2008, 0.6931472
        %v2010 = vlog2.pop %v2003
        %v2011 = vmul.f32 %v2010, 0.6931472
        %v2012 = vadd.f32 %v1970, %v2005
        %v2013 = vadd.f32 %v1973, %v2007
        %v2014 = vadd.f32 %v1976, %v2009
        %v2015 = vadd.f32 %v1979, %v2011
        %v2016 = vsub.f32 %v1964, %v2012
        %v2017 = vsub.f32 %v1965, %v2013
        %v2018 = vsub.f32 %v1966, %v2014
        %v2019 = vsub.f32 %v1967, %v2015
        %v2020 = vsel %vm1287, %v2016, -inf
        %v2021 = vrot.slane %v2020, 4
        %v2022 = vmax.f32 %v2020, %v2021
        %v2023 = vrot.slane %v2022, 2
        %v2024 = vmax.f32 %v2022, %v2023
        %v2025 = vrot.slane %v2024, 1
        %v2026 = vmax.f32 %v2024, %v2025
        %v2027 = vsel %vm1287, %v2017, -inf
        %v2028 = vrot.slane %v2027, 4
        %v2029 = vmax.f32 %v2027, %v2028
        %v2030 = vrot.slane %v2029, 2
        %v2031 = vmax.f32 %v2029, %v2030
        %v2032 = vrot.slane %v2031, 1
        %v2033 = vmax.f32 %v2031, %v2032
        %v2034 = vsel %vm1287, %v2018, -inf
        %v2035 = vrot.slane %v2034, 4
        %v2036 = vmax.f32 %v2034, %v2035
        %v2037 = vrot.slane %v2036, 2
        %v2038 = vmax.f32 %v2036, %v2037
        %v2039 = vrot.slane %v2038, 1
        %v2040 = vmax.f32 %v2038, %v2039
        %v2041 = vsel %vm1287, %v2019, -inf
        %v2042 = vrot.slane %v2041, 4
        %v2043 = vmax.f32 %v2041, %v2042
        %v2044 = vrot.slane %v2043, 2
        %v2045 = vmax.f32 %v2043, %v2044
        %v2046 = vrot.slane %v2045, 1
        %v2047 = vmax.f32 %v2045, %v2046
        %v2048 = vsub.f32 %v2016, %v2026
        %v2049 = vsub.f32 %v2017, %v2033
        %v2050 = vsub.f32 %v2018, %v2040
        %v2051 = vsub.f32 %v2019, %v2047
        %v2052 = vmul.f32 %v2048, 1.442695
        %v2053 = vpow.pop %v2052
        %v2054 = vmul.f32 %v2049, 1.442695
        %v2055 = vpow.pop %v2054
        %v2056 = vmul.f32 %v2050, 1.442695
        %v2057 = vpow.pop %v2056
        %v2058 = vmul.f32 %v2051, 1.442695
        %v2059 = vpow.pop %v2058
        %v2060 = vsel %vm1287, %v2053, 0.0
        %v2061 = vrot.slane %v2060, 4
        %v2062 = vadd.f32 %v2060, %v2061
        %v2063 = vrot.slane %v2062, 2
        %v2064 = vadd.f32 %v2062, %v2063
        %v2065 = vrot.slane %v2064, 1
        %v2066 = vadd.f32 %v2064, %v2065
        %v2067 = vsel %vm1287, %v2055, 0.0
        %v2068 = vrot.slane %v2067, 4
        %v2069 = vadd.f32 %v2067, %v2068
        %v2070 = vrot.slane %v2069, 2
        %v2071 = vadd.f32 %v2069, %v2070
        %v2072 = vrot.slane %v2071, 1
        %v2073 = vadd.f32 %v2071, %v2072
        %v2074 = vsel %vm1287, %v2057, 0.0
        %v2075 = vrot.slane %v2074, 4
        %v2076 = vadd.f32 %v2074, %v2075
        %v2077 = vrot.slane %v2076, 2
        %v2078 = vadd.f32 %v2076, %v2077
        %v2079 = vrot.slane %v2078, 1
        %v2080 = vadd.f32 %v2078, %v2079
        %v2081 = vsel %vm1287, %v2059, 0.0
        %v2082 = vrot.slane %v2081, 4
        %v2083 = vadd.f32 %v2081, %v2082
        %v2084 = vrot.slane %v2083, 2
        %v2085 = vadd.f32 %v2083, %v2084
        %v2086 = vrot.slane %v2085, 1
        %v2087 = vadd.f32 %v2085, %v2086
        %v2088 = vlog2.pop %v2066
        %v2089 = vmul.f32 %v2088, 0.6931472
        %v2090 = vlog2.pop %v2073
        %v2091 = vmul.f32 %v2090, 0.6931472
        %v2092 = vlog2.pop %v2080
        %v2093 = vmul.f32 %v2092, 0.6931472
        %v2094 = vlog2.pop %v2087
        %v2095 = vmul.f32 %v2094, 0.6931472
        %v2096 = vadd.f32 %v2026, %v2089
        %v2097 = vadd.f32 %v2033, %v2091
        %v2098 = vadd.f32 %v2040, %v2093
        %v2099 = vadd.f32 %v2047, %v2095
        %v2100 = vsub.f32 %v2016, %v2096
        %v2101 = vsub.f32 %v2017, %v2097
        %v2102 = vsub.f32 %v2018, %v2098
        %v2103 = vsub.f32 %v2019, %v2099
        %v2104 = vsel %vm1287, %v2100, -inf
        %2105 = vmax.xlane.f32.xlu0 %v2104
        %v2106 = vpop.xlane.xlu0 %2105
        %v2107 = vsel %vm1287, %v2101, -inf
        %2108 = vmax.xlane.f32.xlu0 %v2107
        %v2109 = vpop.xlane.xlu0 %2108
        %v2110 = vsel %vm1287, %v2102, -inf
        %2111 = vmax.xlane.f32.xlu0 %v2110
        %v2112 = vpop.xlane.xlu0 %2111
        %v2113 = vsel %vm1287, %v2103, -inf
        %2114 = vmax.xlane.f32.xlu0 %v2113
        %v2115 = vpop.xlane.xlu0 %2114
        %v2116 = vsub.f32 %v2100, %v2106
        %v2117 = vsub.f32 %v2101, %v2109
        %v2118 = vsub.f32 %v2102, %v2112
        %v2119 = vsub.f32 %v2103, %v2115
        %v2120 = vmul.f32 %v2116, 1.442695
        %v2121 = vpow.pop %v2120
        %v2122 = vmul.f32 %v2117, 1.442695
        %v2123 = vpow.pop %v2122
        %v2124 = vmul.f32 %v2118, 1.442695
        %v2125 = vpow.pop %v2124
        %v2126 = vmul.f32 %v2119, 1.442695
        %v2127 = vpow.pop %v2126
        %v2128 = vsel %vm1287, %v2121, 0.0
        %2129 = vadd.xlane.f32.xlu0 %v2128
        %v2130 = vpop.xlane.xlu0 %2129
        %v2131 = vsel %vm1287, %v2123, 0.0
        %2132 = vadd.xlane.f32.xlu0 %v2131
        %v2133 = vpop.xlane.xlu0 %2132
        %v2134 = vsel %vm1287, %v2125, 0.0
        %2135 = vadd.xlane.f32.xlu0 %v2134
        %v2136 = vpop.xlane.xlu0 %2135
        %v2137 = vsel %vm1287, %v2127, 0.0
        %2138 = vadd.xlane.f32.xlu0 %v2137
        %v2139 = vpop.xlane.xlu0 %2138
        %v2140 = vlog2.pop %v2130
        %v2141 = vmul.f32 %v2140, 0.6931472
        %v2142 = vlog2.pop %v2133
        %v2143 = vmul.f32 %v2142, 0.6931472
        %v2144 = vlog2.pop %v2136
        %v2145 = vmul.f32 %v2144, 0.6931472
        %v2146 = vlog2.pop %v2139
        %v2147 = vmul.f32 %v2146, 0.6931472
        %v2148 = vadd.f32 %v2106, %v2141
        %v2149 = vadd.f32 %v2109, %v2143
        %v2150 = vadd.f32 %v2112, %v2145
        %v2151 = vadd.f32 %v2115, %v2147
        %v2152 = vsub.f32 %v2100, %v2148
        %v2153 = vsub.f32 %v2101, %v2149
        %v2154 = vsub.f32 %v2102, %v2150
        %v2155 = vsub.f32 %v2103, %v2151
        %v2156 = vsel %vm1287, %v2152, -inf
        %v2157 = vrot.slane %v2156, 4
        %v2158 = vmax.f32 %v2156, %v2157
        %v2159 = vrot.slane %v2158, 2
        %v2160 = vmax.f32 %v2158, %v2159
        %v2161 = vrot.slane %v2160, 1
        %v2162 = vmax.f32 %v2160, %v2161
        %v2163 = vsel %vm1287, %v2153, -inf
        %v2164 = vrot.slane %v2163, 4
        %v2165 = vmax.f32 %v2163, %v2164
        %v2166 = vrot.slane %v2165, 2
        %v2167 = vmax.f32 %v2165, %v2166
        %v2168 = vrot.slane %v2167, 1
        %v2169 = vmax.f32 %v2167, %v2168
        %v2170 = vsel %vm1287, %v2154, -inf
        %v2171 = vrot.slane %v2170, 4
        %v2172 = vmax.f32 %v2170, %v2171
        %v2173 = vrot.slane %v2172, 2
        %v2174 = vmax.f32 %v2172, %v2173
        %v2175 = vrot.slane %v2174, 1
        %v2176 = vmax.f32 %v2174, %v2175
        %v2177 = vsel %vm1287, %v2155, -inf
        %v2178 = vrot.slane %v2177, 4
        %v2179 = vmax.f32 %v2177, %v2178
        %v2180 = vrot.slane %v2179, 2
        %v2181 = vmax.f32 %v2179, %v2180
        %v2182 = vrot.slane %v2181, 1
        %v2183 = vmax.f32 %v2181, %v2182
        %v2184 = vsub.f32 %v2152, %v2162
        %v2185 = vsub.f32 %v2153, %v2169
        %v2186 = vsub.f32 %v2154, %v2176
        %v2187 = vsub.f32 %v2155, %v2183
        %v2188 = vmul.f32 %v2184, 1.442695
        %v2189 = vpow.pop %v2188
        %v2190 = vmul.f32 %v2185, 1.442695
        %v2191 = vpow.pop %v2190
        %v2192 = vmul.f32 %v2186, 1.442695
        %v2193 = vpow.pop %v2192
        %v2194 = vmul.f32 %v2187, 1.442695
        %v2195 = vpow.pop %v2194
        %v2196 = vsel %vm1287, %v2189, 0.0
        %v2197 = vrot.slane %v2196, 4
        %v2198 = vadd.f32 %v2196, %v2197
        %v2199 = vrot.slane %v2198, 2
        %v2200 = vadd.f32 %v2198, %v2199
        %v2201 = vrot.slane %v2200, 1
        %v2202 = vadd.f32 %v2200, %v2201
        %v2203 = vsel %vm1287, %v2191, 0.0
        %v2204 = vrot.slane %v2203, 4
        %v2205 = vadd.f32 %v2203, %v2204
        %v2206 = vrot.slane %v2205, 2
        %v2207 = vadd.f32 %v2205, %v2206
        %v2208 = vrot.slane %v2207, 1
        %v2209 = vadd.f32 %v2207, %v2208
        %v2210 = vsel %vm1287, %v2193, 0.0
        %v2211 = vrot.slane %v2210, 4
        %v2212 = vadd.f32 %v2210, %v2211
        %v2213 = vrot.slane %v2212, 2
        %v2214 = vadd.f32 %v2212, %v2213
        %v2215 = vrot.slane %v2214, 1
        %v2216 = vadd.f32 %v2214, %v2215
        %v2217 = vsel %vm1287, %v2195, 0.0
        %v2218 = vrot.slane %v2217, 4
        %v2219 = vadd.f32 %v2217, %v2218
        %v2220 = vrot.slane %v2219, 2
        %v2221 = vadd.f32 %v2219, %v2220
        %v2222 = vrot.slane %v2221, 1
        %v2223 = vadd.f32 %v2221, %v2222
        %v2224 = vlog2.pop %v2202
        %v2225 = vmul.f32 %v2224, 0.6931472
        %v2226 = vlog2.pop %v2209
        %v2227 = vmul.f32 %v2226, 0.6931472
        %v2228 = vlog2.pop %v2216
        %v2229 = vmul.f32 %v2228, 0.6931472
        %v2230 = vlog2.pop %v2223
        %v2231 = vmul.f32 %v2230, 0.6931472
        %v2232 = vadd.f32 %v2162, %v2225
        %v2233 = vadd.f32 %v2169, %v2227
        %v2234 = vadd.f32 %v2176, %v2229
        %v2235 = vadd.f32 %v2183, %v2231
        %v2236 = vsub.f32 %v2152, %v2232
        %v2237 = vsub.f32 %v2153, %v2233
        %v2238 = vsub.f32 %v2154, %v2234
        %v2239 = vsub.f32 %v2155, %v2235
        %v2240 = vsel %vm1287, %v2236, -inf
        %2241 = vmax.xlane.f32.xlu0 %v2240
        %v2242 = vpop.xlane.xlu0 %2241
        %v2243 = vsel %vm1287, %v2237, -inf
        %2244 = vmax.xlane.f32.xlu0 %v2243
        %v2245 = vpop.xlane.xlu0 %2244
        %v2246 = vsel %vm1287, %v2238, -inf
        %2247 = vmax.xlane.f32.xlu0 %v2246
        %v2248 = vpop.xlane.xlu0 %2247
        %v2249 = vsel %vm1287, %v2239, -inf
        %2250 = vmax.xlane.f32.xlu0 %v2249
        %v2251 = vpop.xlane.xlu0 %2250
        %v2252 = vsub.f32 %v2236, %v2242
        %v2253 = vsub.f32 %v2237, %v2245
        %v2254 = vsub.f32 %v2238, %v2248
        %v2255 = vsub.f32 %v2239, %v2251
        %v2256 = vmul.f32 %v2252, 1.442695
        %v2257 = vpow.pop %v2256
        %v2258 = vmul.f32 %v2253, 1.442695
        %v2259 = vpow.pop %v2258
        %v2260 = vmul.f32 %v2254, 1.442695
        %v2261 = vpow.pop %v2260
        %v2262 = vmul.f32 %v2255, 1.442695
        %v2263 = vpow.pop %v2262
        %v2264 = vsel %vm1287, %v2257, 0.0
        %2265 = vadd.xlane.f32.xlu0 %v2264
        %v2266 = vpop.xlane.xlu0 %2265
        %v2267 = vsel %vm1287, %v2259, 0.0
        %2268 = vadd.xlane.f32.xlu0 %v2267
        %v2269 = vpop.xlane.xlu0 %2268
        %v2270 = vsel %vm1287, %v2261, 0.0
        %2271 = vadd.xlane.f32.xlu0 %v2270
        %v2272 = vpop.xlane.xlu0 %2271
        %v2273 = vsel %vm1287, %v2263, 0.0
        %2274 = vadd.xlane.f32.xlu0 %v2273
        %v2275 = vpop.xlane.xlu0 %2274
        %v2276 = vlog2.pop %v2266
        %v2277 = vmul.f32 %v2276, 0.6931472
        %v2278 = vlog2.pop %v2269
        %v2279 = vmul.f32 %v2278, 0.6931472
        %v2280 = vlog2.pop %v2272
        %v2281 = vmul.f32 %v2280, 0.6931472
        %v2282 = vlog2.pop %v2275
        %v2283 = vmul.f32 %v2282, 0.6931472
        %v2284 = vadd.f32 %v2242, %v2277
        %v2285 = vadd.f32 %v2245, %v2279
        %v2286 = vadd.f32 %v2248, %v2281
        %v2287 = vadd.f32 %v2251, %v2283
        %v2288 = vsub.f32 %v2236, %v2284
        %v2289 = vsub.f32 %v2237, %v2285
        %v2290 = vsub.f32 %v2238, %v2286
        %v2291 = vsub.f32 %v2239, %v2287
        %v2292 = vsel %vm1287, %v2288, -inf
        %v2293 = vrot.slane %v2292, 4
        %v2294 = vmax.f32 %v2292, %v2293
        %v2295 = vrot.slane %v2294, 2
        %v2296 = vmax.f32 %v2294, %v2295
        %v2297 = vrot.slane %v2296, 1
        %v2298 = vmax.f32 %v2296, %v2297
        %v2299 = vsel %vm1287, %v2289, -inf
        %v2300 = vrot.slane %v2299, 4
        %v2301 = vmax.f32 %v2299, %v2300
        %v2302 = vrot.slane %v2301, 2
        %v2303 = vmax.f32 %v2301, %v2302
        %v2304 = vrot.slane %v2303, 1
        %v2305 = vmax.f32 %v2303, %v2304
        %v2306 = vsel %vm1287, %v2290, -inf
        %v2307 = vrot.slane %v2306, 4
        %v2308 = vmax.f32 %v2306, %v2307
        %v2309 = vrot.slane %v2308, 2
        %v2310 = vmax.f32 %v2308, %v2309
        %v2311 = vrot.slane %v2310, 1
        %v2312 = vmax.f32 %v2310, %v2311
        %v2313 = vsel %vm1287, %v2291, -inf
        %v2314 = vrot.slane %v2313, 4
        %v2315 = vmax.f32 %v2313, %v2314
        %v2316 = vrot.slane %v2315, 2
        %v2317 = vmax.f32 %v2315, %v2316
        %v2318 = vrot.slane %v2317, 1
        %v2319 = vmax.f32 %v2317, %v2318
        %v2320 = vsub.f32 %v2288, %v2298
        %v2321 = vsub.f32 %v2289, %v2305
        %v2322 = vsub.f32 %v2290, %v2312
        %v2323 = vsub.f32 %v2291, %v2319
        %v2324 = vmul.f32 %v2320, 1.442695
        %v2325 = vpow.pop %v2324
        %v2326 = vmul.f32 %v2321, 1.442695
        %v2327 = vpow.pop %v2326
        %v2328 = vmul.f32 %v2322, 1.442695
        %v2329 = vpow.pop %v2328
        %v2330 = vmul.f32 %v2323, 1.442695
        %v2331 = vpow.pop %v2330
        %v2332 = vsel %vm1287, %v2325, 0.0
        %v2333 = vrot.slane %v2332, 4
        %v2334 = vadd.f32 %v2332, %v2333
        %v2335 = vrot.slane %v2334, 2
        %v2336 = vadd.f32 %v2334, %v2335
        %v2337 = vrot.slane %v2336, 1
        %v2338 = vadd.f32 %v2336, %v2337
        %v2339 = vsel %vm1287, %v2327, 0.0
        %v2340 = vrot.slane %v2339, 4
        %v2341 = vadd.f32 %v2339, %v2340
        %v2342 = vrot.slane %v2341, 2
        %v2343 = vadd.f32 %v2341, %v2342
        %v2344 = vrot.slane %v2343, 1
        %v2345 = vadd.f32 %v2343, %v2344
        %v2346 = vsel %vm1287, %v2329, 0.0
        %v2347 = vrot.slane %v2346, 4
        %v2348 = vadd.f32 %v2346, %v2347
        %v2349 = vrot.slane %v2348, 2
        %v2350 = vadd.f32 %v2348, %v2349
        %v2351 = vrot.slane %v2350, 1
        %v2352 = vadd.f32 %v2350, %v2351
        %v2353 = vsel %vm1287, %v2331, 0.0
        %v2354 = vrot.slane %v2353, 4
        %v2355 = vadd.f32 %v2353, %v2354
        %v2356 = vrot.slane %v2355, 2
        %v2357 = vadd.f32 %v2355, %v2356
        %v2358 = vrot.slane %v2357, 1
        %v2359 = vadd.f32 %v2357, %v2358
        %v2360 = vlog2.pop %v2338
        %v2361 = vmul.f32 %v2360, 0.6931472
        %v2362 = vlog2.pop %v2345
        %v2363 = vmul.f32 %v2362, 0.6931472
        %v2364 = vlog2.pop %v2352
        %v2365 = vmul.f32 %v2364, 0.6931472
        %v2366 = vlog2.pop %v2359
        %v2367 = vmul.f32 %v2366, 0.6931472
        %v2368 = vadd.f32 %v2298, %v2361
        %v2369 = vadd.f32 %v2305, %v2363
        %v2370 = vadd.f32 %v2312, %v2365
        %v2371 = vadd.f32 %v2319, %v2367
        %v2372 = vsub.f32 %v2288, %v2368
        %v2373 = vsub.f32 %v2289, %v2369
        %v2374 = vsub.f32 %v2290, %v2370
        %v2375 = vsub.f32 %v2291, %v2371
        %v2376 = vmul.f32 %v2372, 1.442695
        %v2377 = vpow.pop %v2376
        %v2378 = vmul.f32 %v2373, 1.442695
        %v2379 = vpow.pop %v2378
        %v2380 = vmul.f32 %v2374, 1.442695
        %v2381 = vpow.pop %v2380
        %v2382 = vmul.f32 %v2375, 1.442695
        %v2383 = vpow.pop %v2382
        %2384 = vst.msk [vmem:[%s200] sm:$0xff] %vm1287, %v2377
        %2385 = vst.msk [vmem:[%s200 + $0x8] sm:$0xff] %vm1287, %v2379
        %2386 = vst.msk [vmem:[%s200 + $0x10] sm:$0xff] %vm1287, %v2381
        %2387 = vst.msk [vmem:[%s200 + $0x18] sm:$0xff] %vm1287, %v2383
        %s2388 = sand.u32 %s103, 1
        %s2389 = scalar_lea.sflag [#allocation3], %s2388
        %s2390 = sand.u32 %s103, 1
        %s2391 = smul.addr %s2390, 32
        %s2392 = scalar_lea.vmem [#allocation2], %s2391
        // Predicated region
        $region33: #{tpu_custom_call.1} parent=31 // pred_check
          %p2393 = pneg %p113
        $region34: #{tpu_custom_call.1} parent=31 // pred_check_branch
          %2395 = sbr.rel (%p2393) target = $region36
        $region35: #{tpu_custom_call.1} parent=31 // pred_region
          %s2396 = smul.u32 4, %s17
          %s2398 = ssub.s32 512, 512
          %2399 = vsyncadd %s2389, %s2398
          %s2400 = smul.addr %s2396, 128
          %s2401 = scalar_lea.hbm %s3, %s2400
          %s2402 = sshll.u32 %s2392, 4
          %s2403 = int_to_ptr.vmem [resolvable:$true] %s2402
          %2408 = dma.vmem_to_hbm [thread:$0]  %s2403, 512, %s2401, %s2389, 128, 128, 8
        $region36: #{tpu_custom_call.1} parent=31 // pred_fallthru
          _
      $region32: #{tpu_custom_call.1} parent=5 // pred_fallthru
        _
      %p2409 = scmp.le.s32.totalorder 2, %s12
      // Predicated region
      $region37: #{tpu_custom_call.1} parent=5 // pred_check
        %p2410 = pneg %p2409
      $region38: #{tpu_custom_call.1} parent=5 // pred_check_branch
        %2412 = sbr.rel (%p2410) target = $region40
      $region39: #{tpu_custom_call.1} parent=5 // pred_region
        %s2413 = ssub.s32 %s12, 2
        // Predicated region
        $region41: #{tpu_custom_call.1} parent=39 // pred_check
          %p2414 = pneg %p119
        $region42: #{tpu_custom_call.1} parent=39 // pred_check_branch
          %2416 = sbr.rel (%p2414) target = $region44
        $region43: #{tpu_custom_call.1} parent=39 // pred_region
          %s2417 = sand.u32 %s104, 1
          %s2418 = scalar_lea.sflag [#allocation3], %s2417
          %s2419 = sand.u32 %s104, 1
          %s2420 = smul.addr %s2419, 32
          %s2421 = scalar_lea.vmem [#allocation2], %s2420
          %2422 = dma.done %s2418, 512
        $region44: #{tpu_custom_call.1} parent=39 // pred_fallthru
          _
      $region40: #{tpu_custom_call.1} parent=5 // pred_fallthru
        _
    $region6: #{tpu_custom_call.1} parent=1 // loop_footer
      %s16 = sadd.s32 1, %s12
    $region7: #{tpu_custom_call.1} parent=1 // loop_footer_branch
      %11 = sbr.rel target = $region3
    $region8: #{tpu_custom_call.1} parent=1 // loop_exit
      _
    %2423 = vsyncpa [#allocation3], 1
    %s2424 = scalar_lea.sflag [#allocation3], 1
    %2425 = vsyncpa %s2424, 1

</llo_original>
